<compile_context>
chip_gen: v5e
topology: v5e:2x2
jax: 0.10.0
libtpu: 0.0.40
codegen_flags: <defaults>
</compile_context>

<pallas_src>
import numpy as np

import jax
import jax.numpy as jnp
from jax.experimental import pallas as pl
from jax.experimental.pallas import tpu as pltpu

HIDDEN = 32      # encoder hidden width
LATENT = 32      # latent_size of SparseResidualEncoder output (per cluster)
TILE_N = 512     # points per grid step (lane axis of the streamed features)
CB = 128         # clusters per block (lane axis of the pooled accumulator)


def _round_up(n, m):
    return ((n + m - 1) // m) * m


# ----------------------------------------------------------------------------
# Pallas kernel
#   grid = (num_cluster_blocks [parallel], num_point_tiles [arbitrary])
#   Transposed (feature, point) layout so the big tensors are lane-dense.
# ----------------------------------------------------------------------------
def _encoder_kernel(blk_lo_ref, blk_hi_ref,                     # SMEM prefetch
                    x_ref, off_ref, end_ref, cnt_ref,
                    w1_ref, b1_ref, w2t_ref, b2_ref, w3t_ref, b3_ref,
                    out_ref, acc_ref):
    # blk_lo/hi_ref: (nblk,) int32  per-cluster-block point interval (SMEM)
    # x_ref:   (1, TILE_N)  bf16   streamed point values
    # off_ref: (1, CB)      int32  segment start (global point index)
    # end_ref: (1, CB)      int32  segment end   (exclusive)
    # cnt_ref: (1, CB)      f32    segment length (>= 1 for padded clusters)
    # w1_ref:  (H, 1)   b1_ref: (H, 1)
    # w2t_ref: (H, H)   b2_ref: (H, 1)
    # w3t_ref: (L, H)   b3_ref: (L, 1)
    # out_ref: (L, CB)
    # acc_ref: (H, CB)  f32 scratch (per-cluster running sums)
    j = pl.program_id(0)                       # cluster-block index
    k = pl.program_id(1)                       # point-tile index
    tn = x_ref.shape[1]

    @pl.when(k == 0)
    def _():
        acc_ref[...] = jnp.zeros_like(acc_ref)

    # Clusters are contiguous and ordered in cnn_data, so this cluster block
    # only touches points in [blk_lo, blk_hi). Skip all compute otherwise.
    tile_lo = k * tn
    intersects = jnp.logical_and(blk_lo_ref[j] < tile_lo + tn,
                                 blk_hi_ref[j] > tile_lo)

    @pl.when(intersects)
    def _():
        # ---- point-wise MLP (feature on sublanes, points on lanes) ---------
        v = x_ref[...].astype(jnp.float32)                          # (1, TN)
        h1 = jnp.maximum(w1_ref[...] * v + b1_ref[...], 0.0)        # (H, TN)  VPU
        h2 = jnp.dot(w2t_ref[...], h1, preferred_element_type=jnp.float32)
        h2 = jnp.maximum(h2 + b2_ref[...], 0.0)                     # (H, TN)  MXU

        # ---- contiguous-segment pooling: interval mask -> MXU segment-sum --
        cb = off_ref.shape[1]
        pt = jax.lax.broadcasted_iota(jnp.int32, (tn, cb), 0) + tile_lo
        mask = ((pt >= off_ref[...]) & (pt < end_ref[...])).astype(jnp.float32)
        acc_ref[...] += jnp.dot(h2, mask,
                                preferred_element_type=jnp.float32)  # (H, CB)

    @pl.when(k == pl.num_programs(1) - 1)
    def _():
        inv = pl.reciprocal(cnt_ref[...], approx=True)           # (1, CB) EUP
        pooled = acc_ref[...] * inv                              # (H, CB)
        out = jnp.dot(w3t_ref[...], pooled, preferred_element_type=jnp.float32)
        out_ref[...] = out + b3_ref[...]                         # (L, CB)


@jax.jit
def _run_encoder(blk_lo, blk_hi, x, off, end, cnt,
                 w1, b1, w2t, b2, w3t, b3):
    npad = x.shape[1]
    cpad = off.shape[1]
    grid = (cpad // CB, npad // TILE_N)
    const = lambda j, k, lo, hi: (0, 0)
    return pl.pallas_call(
        _encoder_kernel,
        out_shape=jax.ShapeDtypeStruct((LATENT, cpad), jnp.float32),
        grid_spec=pltpu.PrefetchScalarGridSpec(
            num_scalar_prefetch=2,                                # blk_lo, blk_hi
            grid=grid,
            in_specs=[
                pl.BlockSpec((1, TILE_N), lambda j, k, lo, hi: (0, k)),  # values
                pl.BlockSpec((1, CB), lambda j, k, lo, hi: (0, j)),      # seg off
                pl.BlockSpec((1, CB), lambda j, k, lo, hi: (0, j)),      # seg end
                pl.BlockSpec((1, CB), lambda j, k, lo, hi: (0, j)),      # seg cnt
                pl.BlockSpec((HIDDEN, 1), const),                 # w1 (column)
                pl.BlockSpec((HIDDEN, 1), const),                 # b1
                pl.BlockSpec((HIDDEN, HIDDEN), const),            # w2^T
                pl.BlockSpec((HIDDEN, 1), const),                 # b2
                pl.BlockSpec((LATENT, HIDDEN), const),            # w3^T
                pl.BlockSpec((LATENT, 1), const),                 # b3
            ],
            out_specs=pl.BlockSpec((LATENT, CB), lambda j, k, lo, hi: (0, j)),
            scratch_shapes=[pltpu.VMEM((HIDDEN, CB), jnp.float32)],
        ),
        compiler_params=pltpu.CompilerParams(
            dimension_semantics=("parallel", "arbitrary")),
    )(blk_lo, blk_hi, x, off, end, cnt, w1, b1, w2t, b2, w3t, b3)


# ----------------------------------------------------------------------------
# Module wrapper
# ----------------------------------------------------------------------------
class ClustCNNMinkNodeEncoderPallas:
    """Pallas port of ClustCNNMinkNodeEncoder (synthetic deterministic init)."""

    def __init__(self, key):
        k1, k2, k3, k4, k5, k6 = jax.random.split(key, 6)
        # Encoder consumes 1 input feature (the "value" column 4).
        self.w1 = jax.random.normal(k1, (HIDDEN, 1), jnp.float32) * 0.1
        self.b1 = jax.random.normal(k4, (HIDDEN, 1), jnp.float32) * 0.05
        self.w2t = jax.random.normal(k2, (HIDDEN, HIDDEN), jnp.float32) * 0.1
        self.b2 = jax.random.normal(k5, (HIDDEN, 1), jnp.float32) * 0.05
        self.w3t = jax.random.normal(k3, (LATENT, HIDDEN), jnp.float32) * 0.1
        self.b3 = jax.random.normal(k6, (LATENT, 1), jnp.float32) * 0.05

    def __call__(self, data, clusts):
        # ---- host glue: flat indices / contiguous segment metadata ---------
        # cnn_data is built (conceptually) by concatenating clusters in order,
        # so cluster i occupies rows [offsets[i], offsets[i]+len[i]) and the
        # cluster-id column is carried implicitly by those offsets.
        flat_idx = (np.concatenate([np.asarray(c, dtype=np.int32) for c in clusts])
                    if len(clusts) else np.zeros((0,), np.int32))
        lengths = np.array([len(c) for c in clusts], dtype=np.int32)
        offsets = np.zeros_like(lengths)
        if lengths.size:
            offsets[1:] = np.cumsum(lengths)[:-1]
        ntot = int(flat_idx.shape[0])
        nclu = len(clusts)

        # Bucketed padding -> few distinct compiled shapes, aligned layouts.
        npad = max(_round_up(max(ntot, 1), TILE_N), TILE_N)
        cpad = max(_round_up(max(nclu, 1), CB), CB)
        nblk = cpad // CB

        # Single fused gather of the value column; stream as bf16.
        values = jnp.asarray(data)[jnp.asarray(flat_idx), 4]
        x = jnp.zeros((1, npad), jnp.bfloat16)
        x = x.at[0, :ntot].set(values.astype(jnp.bfloat16))

        off = np.full((1, cpad), npad, np.int32)   # padded clusters: empty interval
        end = np.full((1, cpad), npad, np.int32)
        cnt = np.ones((1, cpad), np.float32)
        off[0, :nclu] = offsets
        end[0, :nclu] = offsets + lengths
        cnt[0, :nclu] = np.maximum(lengths, 1)

        # Per-cluster-block point interval (for in-kernel compute skipping).
        blk_lo = np.full((nblk,), npad, np.int32)
        blk_hi = np.full((nblk,), npad, np.int32)
        for b in range(nblk):
            s, e = b * CB, min((b + 1) * CB, nclu)
            if e > s:
                blk_lo[b] = int(offsets[s:e].min())
                blk_hi[b] = int((offsets[s:e] + lengths[s:e]).max())

        out = _run_encoder(jnp.asarray(blk_lo), jnp.asarray(blk_hi),
                           x, jnp.asarray(off), jnp.asarray(end), jnp.asarray(cnt),
                           self.w1, self.b1, self.w2t, self.b2, self.w3t, self.b3)
        return out.T[:nclu]                        # (num_clusters, LATENT)

    # pure-JAX reference of the same encoder, for verification
    def reference(self, data, clusts):
        flat_idx = np.concatenate([np.asarray(c, dtype=np.int32) for c in clusts])
        lengths = [len(c) for c in clusts]
        v = jnp.asarray(data)[jnp.asarray(flat_idx), 4]
        v = v.astype(jnp.bfloat16).astype(jnp.float32)   # match streamed dtype
        h1 = jnp.maximum(v[:, None] * self.w1.T + self.b1.T, 0.0)   # (N, H)
        h2 = jnp.maximum(h1 @ self.w2t.T + self.b2.T, 0.0)          # (N, H)
        outs, start = [], 0
        for n in lengths:
            seg = h2[start:start + n]
            pooled = seg.sum(0, keepdims=True) / max(n, 1)
            outs.append(pooled @ self.w3t.T + self.b3.T)
            start += n
        return jnp.concatenate(outs, axis=0)


if __name__ == "__main__":
    key = jax.random.PRNGKey(0)
    kd, kp = jax.random.split(key)

    # data: (num_points, 5) = [batch_id, x, y, z, value]
    num_points = 1200
    data = jax.random.uniform(kd, (num_points, 5), jnp.float32) * 10.0

    # clusters: contiguous index lists into `data` (arbitrary lists also work)
    bounds = [0, 150, 420, 500, 777, 900, 1111, 1200]
    clusts = [list(range(bounds[i], bounds[i + 1])) for i in range(len(bounds) - 1)]

    model = ClustCNNMinkNodeEncoderPallas(kp)
    out = jax.block_until_ready(model(data, clusts))
    ref = jax.block_until_ready(model.reference(data, clusts))

    assert out.shape == (len(clusts), LATENT), out.shape
    err = float(jnp.max(jnp.abs(out - ref)))
    assert jnp.allclose(out, ref, rtol=2e-2, atol=2e-2), f"mismatch vs reference: {err}"

    print("KERNEL_OK")
</pallas_src>

<mosaic_0001>
module attributes {stable_mosaic.version = 11 : i64} {
  func.func @_encoder_kernel(%arg0: i32, %arg1: i32, %arg2: memref<1xi32, #tpu.memory_space<smem>>, %arg3: memref<1xi32, #tpu.memory_space<smem>>, %arg4: memref<1x512xbf16, #tpu.memory_space<vmem>>, %arg5: memref<1x128xi32, #tpu.memory_space<vmem>>, %arg6: memref<1x128xi32, #tpu.memory_space<vmem>>, %arg7: memref<1x128xf32, #tpu.memory_space<vmem>>, %arg8: memref<32x1xf32, #tpu.memory_space<vmem>>, %arg9: memref<32x1xf32, #tpu.memory_space<vmem>>, %arg10: memref<32x32xf32, #tpu.memory_space<vmem>>, %arg11: memref<32x1xf32, #tpu.memory_space<vmem>>, %arg12: memref<32x32xf32, #tpu.memory_space<vmem>>, %arg13: memref<32x1xf32, #tpu.memory_space<vmem>>, %arg14: memref<32x128xf32, #tpu.memory_space<vmem>>, %arg15: memref<32x128xf32, #tpu.memory_space<vmem>>) attributes {dimension_semantics = [#tpu.dimension_semantics<parallel>, #tpu.dimension_semantics<arbitrary>], iteration_bounds = array<i64: 1, 3>, scalar_prefetch = 2 : i64, scratch_operands = 1 : i64, tpu.core_type = #tpu.core_type<tc>, window_params = [{transform_indices = @transform_0, window_bounds = array<i64: 1, 512>}, {transform_indices = @transform_1, window_bounds = array<i64: 1, 128>}, {transform_indices = @transform_2, window_bounds = array<i64: 1, 128>}, {transform_indices = @transform_3, window_bounds = array<i64: 1, 128>}, {pipeline_mode = #tpu.pipeline_mode<synchronous>, transform_indices = @transform_4, window_bounds = array<i64: 32, 1>}, {pipeline_mode = #tpu.pipeline_mode<synchronous>, transform_indices = @transform_5, window_bounds = array<i64: 32, 1>}, {pipeline_mode = #tpu.pipeline_mode<synchronous>, transform_indices = @transform_6, window_bounds = array<i64: 32, 32>}, {pipeline_mode = #tpu.pipeline_mode<synchronous>, transform_indices = @transform_7, window_bounds = array<i64: 32, 1>}, {pipeline_mode = #tpu.pipeline_mode<synchronous>, transform_indices = @transform_8, window_bounds = array<i64: 32, 32>}, {pipeline_mode = #tpu.pipeline_mode<synchronous>, transform_indices = @transform_9, window_bounds = array<i64: 32, 1>}, {transform_indices = @transform_10, window_bounds = array<i64: 32, 128>}]} {
    %c0_i32 = arith.constant 0 : i32
    %0 = arith.cmpi eq, %arg1, %c0_i32 : i32
    %1 = arith.extui %0 : i1 to i32
    %c0_i32_0 = arith.constant 0 : i32
    %2 = arith.cmpi ne, %1, %c0_i32_0 : i32
    scf.if %2 {
      %cst = arith.constant 0.000000e+00 : f32
      %17 = vector.broadcast %cst : f32 to vector<32x128xf32>
      %c0 = arith.constant 0 : index
      %c0_4 = arith.constant 0 : index
      %18 = vector.load %arg15[%c0, %c0_4] : memref<32x128xf32, #tpu.memory_space<vmem>>, vector<32x128xf32>
      tpu.vector_store %arg15[%c0, %c0_4], %17 {strides = array<i32>} : memref<32x128xf32, #tpu.memory_space<vmem>>, vector<32x128xf32>,
    } else {
    }
    %c512_i32 = arith.constant 512 : i32
    %3 = arith.muli %arg1, %c512_i32 : i32
    %4 = arith.index_cast %arg0 : i32 to index
    %5 = memref.load %arg2[%4] : memref<1xi32, #tpu.memory_space<smem>>
    %c512_i32_1 = arith.constant 512 : i32
    %6 = arith.addi %3, %c512_i32_1 : i32
    %7 = arith.cmpi slt, %5, %6 : i32
    %8 = arith.index_cast %arg0 : i32 to index
    %9 = memref.load %arg3[%8] : memref<1xi32, #tpu.memory_space<smem>>
    %10 = arith.cmpi sgt, %9, %3 : i32
    %11 = arith.andi %7, %10 : i1
    %12 = arith.extui %11 : i1 to i32
    %c0_i32_2 = arith.constant 0 : i32
    %13 = arith.cmpi ne, %12, %c0_i32_2 : i32
    scf.if %13 {
      %c0 = arith.constant 0 : index
      %c0_4 = arith.constant 0 : index
      %17 = vector.load %arg4[%c0, %c0_4] : memref<1x512xbf16, #tpu.memory_space<vmem>>, vector<1x512xbf16>
      %18 = arith.extf %17 : vector<1x512xbf16> to vector<1x512xf32>
      %c0_5 = arith.constant 0 : index
      %c0_6 = arith.constant 0 : index
      %19 = vector.load %arg8[%c0_5, %c0_6] : memref<32x1xf32, #tpu.memory_space<vmem>>, vector<32x1xf32>
      %20 = vector.broadcast %19 : vector<32x1xf32> to vector<32x512xf32>
      %21 = vector.broadcast %18 : vector<1x512xf32> to vector<32x512xf32>
      %22 = arith.mulf %20, %21 : vector<32x512xf32>
      %c0_7 = arith.constant 0 : index
      %c0_8 = arith.constant 0 : index
      %23 = vector.load %arg9[%c0_7, %c0_8] : memref<32x1xf32, #tpu.memory_space<vmem>>, vector<32x1xf32>
      %24 = vector.broadcast %23 : vector<32x1xf32> to vector<32x512xf32>
      %25 = arith.addf %22, %24 : vector<32x512xf32>
      %cst = arith.constant 0.000000e+00 : f32
      %26 = vector.broadcast %cst : f32 to vector<32x512xf32>
      %27 = arith.maximumf %25, %26 : vector<32x512xf32>
      %c0_9 = arith.constant 0 : index
      %c0_10 = arith.constant 0 : index
      %28 = vector.load %arg10[%c0_9, %c0_10] : memref<32x32xf32, #tpu.memory_space<vmem>>, vector<32x32xf32>
      %cst_11 = arith.constant dense<0.000000e+00> : vector<32x512xf32>
      %29 = tpu.matmul %28, %27, %cst_11 {dimension_numbers = #tpu.dot_dimension_numbers<[1], [0], [0], [1], [0, 0, 1, 1], [], []>} : vector<32x32xf32>, vector<32x512xf32>, vector<32x512xf32> -> vector<32x512xf32>
      %c0_12 = arith.constant 0 : index
      %c0_13 = arith.constant 0 : index
      %30 = vector.load %arg11[%c0_12, %c0_13] : memref<32x1xf32, #tpu.memory_space<vmem>>, vector<32x1xf32>
      %31 = vector.broadcast %30 : vector<32x1xf32> to vector<32x512xf32>
      %32 = arith.addf %29, %31 : vector<32x512xf32>
      %cst_14 = arith.constant 0.000000e+00 : f32
      %33 = vector.broadcast %cst_14 : f32 to vector<32x512xf32>
      %34 = arith.maximumf %32, %33 : vector<32x512xf32>
      %35 = tpu.iota {dimensions = array<i32: 0>} : vector<512x128xi32>
      %36 = vector.broadcast %3 : i32 to vector<512x128xi32>
      %37 = arith.addi %35, %36 : vector<512x128xi32>
      %c0_15 = arith.constant 0 : index
      %c0_16 = arith.constant 0 : index
      %38 = vector.load %arg5[%c0_15, %c0_16] : memref<1x128xi32, #tpu.memory_space<vmem>>, vector<1x128xi32>
      %39 = vector.broadcast %38 : vector<1x128xi32> to vector<512x128xi32>
      %40 = arith.cmpi sge, %37, %39 : vector<512x128xi32>
      %c0_17 = arith.constant 0 : index
      %c0_18 = arith.constant 0 : index
      %41 = vector.load %arg6[%c0_17, %c0_18] : memref<1x128xi32, #tpu.memory_space<vmem>>, vector<1x128xi32>
      %42 = vector.broadcast %41 : vector<1x128xi32> to vector<512x128xi32>
      %43 = arith.cmpi slt, %37, %42 : vector<512x128xi32>
      %44 = arith.andi %40, %43 : vector<512x128xi1>
      %45 = arith.extui %44 : vector<512x128xi1> to vector<512x128xi32>
      %46 = arith.sitofp %45 : vector<512x128xi32> to vector<512x128xf32>
      %c0_19 = arith.constant 0 : index
      %c0_20 = arith.constant 0 : index
      %47 = vector.load %arg15[%c0_19, %c0_20] : memref<32x128xf32, #tpu.memory_space<vmem>>, vector<32x128xf32>
      %cst_21 = arith.constant dense<0.000000e+00> : vector<32x128xf32>
      %48 = tpu.matmul %34, %46, %cst_21 {dimension_numbers = #tpu.dot_dimension_numbers<[1], [0], [0], [1], [0, 0, 1, 1], [], []>} : vector<32x512xf32>, vector<512x128xf32>, vector<32x128xf32> -> vector<32x128xf32>
      %49 = arith.addf %47, %48 : vector<32x128xf32>
      %c0_22 = arith.constant 0 : index
      %c0_23 = arith.constant 0 : index
      %50 = vector.load %arg15[%c0_22, %c0_23] : memref<32x128xf32, #tpu.memory_space<vmem>>, vector<32x128xf32>
      tpu.vector_store %arg15[%c0_22, %c0_23], %49 {strides = array<i32>} : memref<32x128xf32, #tpu.memory_space<vmem>>, vector<32x128xf32>,
    } else {
    }
    %c2_i32 = arith.constant 2 : i32
    %14 = arith.cmpi eq, %arg1, %c2_i32 : i32
    %15 = arith.extui %14 : i1 to i32
    %c0_i32_3 = arith.constant 0 : i32
    %16 = arith.cmpi ne, %15, %c0_i32_3 : i32
    scf.if %16 {
      %c0 = arith.constant 0 : index
      %c0_4 = arith.constant 0 : index
      %17 = vector.load %arg7[%c0, %c0_4] : memref<1x128xf32, #tpu.memory_space<vmem>>, vector<1x128xf32>
      %18 = tpu.reciprocal %17 {approx = true} : vector<1x128xf32> -> vector<1x128xf32>
      %c0_5 = arith.constant 0 : index
      %c0_6 = arith.constant 0 : index
      %19 = vector.load %arg15[%c0_5, %c0_6] : memref<32x128xf32, #tpu.memory_space<vmem>>, vector<32x128xf32>
      %20 = vector.broadcast %18 : vector<1x128xf32> to vector<32x128xf32>
      %21 = arith.mulf %19, %20 : vector<32x128xf32>
      %c0_7 = arith.constant 0 : index
      %c0_8 = arith.constant 0 : index
      %22 = vector.load %arg12[%c0_7, %c0_8] : memref<32x32xf32, #tpu.memory_space<vmem>>, vector<32x32xf32>
      %cst = arith.constant dense<0.000000e+00> : vector<32x128xf32>
      %23 = tpu.matmul %22, %21, %cst {dimension_numbers = #tpu.dot_dimension_numbers<[1], [0], [0], [1], [0, 0, 1, 1], [], []>} : vector<32x32xf32>, vector<32x128xf32>, vector<32x128xf32> -> vector<32x128xf32>
      %c0_9 = arith.constant 0 : index
      %c0_10 = arith.constant 0 : index
      %24 = vector.load %arg13[%c0_9, %c0_10] : memref<32x1xf32, #tpu.memory_space<vmem>>, vector<32x1xf32>
      %25 = vector.broadcast %24 : vector<32x1xf32> to vector<32x128xf32>
      %26 = arith.addf %23, %25 : vector<32x128xf32>
      %c0_11 = arith.constant 0 : index
      %c0_12 = arith.constant 0 : index
      %27 = vector.load %arg14[%c0_11, %c0_12] : memref<32x128xf32, #tpu.memory_space<vmem>>, vector<32x128xf32>
      tpu.vector_store %arg14[%c0_11, %c0_12], %26 {strides = array<i32>} : memref<32x128xf32, #tpu.memory_space<vmem>>, vector<32x128xf32>,
    } else {
    }
    return
  }
  func.func @transform_0(%arg0: i32, %arg1: i32, %arg2: memref<1xi32, #tpu.memory_space<smem>>, %arg3: memref<1xi32, #tpu.memory_space<smem>>) -> (i32, i32) {
    %c0_i32 = arith.constant 0 : i32
    %c0_i32_0 = arith.constant 0 : i32
    return %c0_i32, %arg1 : i32, i32
  }
  func.func @transform_1(%arg0: i32, %arg1: i32, %arg2: memref<1xi32, #tpu.memory_space<smem>>, %arg3: memref<1xi32, #tpu.memory_space<smem>>) -> (i32, i32) {
    %c0_i32 = arith.constant 0 : i32
    %c0_i32_0 = arith.constant 0 : i32
    return %c0_i32, %arg0 : i32, i32
  }
  func.func @transform_2(%arg0: i32, %arg1: i32, %arg2: memref<1xi32, #tpu.memory_space<smem>>, %arg3: memref<1xi32, #tpu.memory_space<smem>>) -> (i32, i32) {
    %c0_i32 = arith.constant 0 : i32
    %c0_i32_0 = arith.constant 0 : i32
    return %c0_i32, %arg0 : i32, i32
  }
  func.func @transform_3(%arg0: i32, %arg1: i32, %arg2: memref<1xi32, #tpu.memory_space<smem>>, %arg3: memref<1xi32, #tpu.memory_space<smem>>) -> (i32, i32) {
    %c0_i32 = arith.constant 0 : i32
    %c0_i32_0 = arith.constant 0 : i32
    return %c0_i32, %arg0 : i32, i32
  }
  func.func @transform_4(%arg0: i32, %arg1: i32, %arg2: memref<1xi32, #tpu.memory_space<smem>>, %arg3: memref<1xi32, #tpu.memory_space<smem>>) -> (i32, i32) {
    %c0_i32 = arith.constant 0 : i32
    %c0_i32_0 = arith.constant 0 : i32
    %c0_i32_1 = arith.constant 0 : i32
    return %c0_i32, %c0_i32_0 : i32, i32
  }
  func.func @transform_5(%arg0: i32, %arg1: i32, %arg2: memref<1xi32, #tpu.memory_space<smem>>, %arg3: memref<1xi32, #tpu.memory_space<smem>>) -> (i32, i32) {
    %c0_i32 = arith.constant 0 : i32
    %c0_i32_0 = arith.constant 0 : i32
    %c0_i32_1 = arith.constant 0 : i32
    return %c0_i32, %c0_i32_0 : i32, i32
  }
  func.func @transform_6(%arg0: i32, %arg1: i32, %arg2: memref<1xi32, #tpu.memory_space<smem>>, %arg3: memref<1xi32, #tpu.memory_space<smem>>) -> (i32, i32) {
    %c0_i32 = arith.constant 0 : i32
    %c0_i32_0 = arith.constant 0 : i32
    %c0_i32_1 = arith.constant 0 : i32
    return %c0_i32, %c0_i32_0 : i32, i32
  }
  func.func @transform_7(%arg0: i32, %arg1: i32, %arg2: memref<1xi32, #tpu.memory_space<smem>>, %arg3: memref<1xi32, #tpu.memory_space<smem>>) -> (i32, i32) {
    %c0_i32 = arith.constant 0 : i32
    %c0_i32_0 = arith.constant 0 : i32
    %c0_i32_1 = arith.constant 0 : i32
    return %c0_i32, %c0_i32_0 : i32, i32
  }
  func.func @transform_8(%arg0: i32, %arg1: i32, %arg2: memref<1xi32, #tpu.memory_space<smem>>, %arg3: memref<1xi32, #tpu.memory_space<smem>>) -> (i32, i32) {
    %c0_i32 = arith.constant 0 : i32
    %c0_i32_0 = arith.constant 0 : i32
    %c0_i32_1 = arith.constant 0 : i32
    return %c0_i32, %c0_i32_0 : i32, i32
  }
  func.func @transform_9(%arg0: i32, %arg1: i32, %arg2: memref<1xi32, #tpu.memory_space<smem>>, %arg3: memref<1xi32, #tpu.memory_space<smem>>) -> (i32, i32) {
    %c0_i32 = arith.constant 0 : i32
    %c0_i32_0 = arith.constant 0 : i32
    %c0_i32_1 = arith.constant 0 : i32
    return %c0_i32, %c0_i32_0 : i32, i32
  }
  func.func @transform_10(%arg0: i32, %arg1: i32, %arg2: memref<1xi32, #tpu.memory_space<smem>>, %arg3: memref<1xi32, #tpu.memory_space<smem>>) -> (i32, i32) {
    %c0_i32 = arith.constant 0 : i32
    %c0_i32_0 = arith.constant 0 : i32
    return %c0_i32, %arg0 : i32, i32
  }
}

</mosaic_0001>

<llo_original>
// kernel: _run_encoder.1
$region0: #{_run_encoder.1}
  #allocation0 [shape = 'u32[]', space=smem, size = 0x4, offset = 0x4, fixed_abs, tag = 'smem constant byte address 0x4 - core index']
  #allocation1 [shape = 'u32[72,128]{1,0:T(1,128)}', space=vmem, size = 0x9000, scoped, tag = 'internal scratch']
  #allocation2 [shape = 'f32[32,128]{1,0:T(8,128)}', space=vmem, size = 0x4000, scoped, tag = 'scratch operand']
  #allocation3 [shape = 's32[1]{0}', space=sflag, size = 0x4, scoped, tag = 'scoped memory for _run_encoder.1']
  #allocation4 [shape = 's32[1]{0:T(128)S(6)}', space=smem, size = 0x200, scoped, tag = 'prefetched SMEM operand 0']
  #allocation5 [shape = 's32[1]{0:T(128)S(6)}', space=smem, size = 0x200, scoped, tag = 'prefetched SMEM operand 1']
  %s0 = inlined_call_operand.<no memory space> [shape: s32[1], index: 0, kind: input, shape index: {}]
  %s1 = inlined_call_operand.<no memory space> [shape: s32[1], index: 1, kind: input, shape index: {}]
  %s2 = inlined_call_operand.vmem [shape: bf16[1,1536], index: 2, kind: input, shape index: {}]
  %s3 = inlined_call_operand.vmem [shape: s32[1,128], index: 3, kind: input, shape index: {}]
  %s4 = inlined_call_operand.vmem [shape: s32[1,128], index: 4, kind: input, shape index: {}]
  %s5 = inlined_call_operand.vmem [shape: f32[1,128], index: 5, kind: input, shape index: {}]
  %s6 = inlined_call_operand.vmem [shape: f32[32,1], index: 6, kind: input, shape index: {}]
  %s7 = inlined_call_operand.vmem [shape: f32[32,1], index: 7, kind: input, shape index: {}]
  %s8 = inlined_call_operand.vmem [shape: f32[32,32], index: 8, kind: input, shape index: {}]
  %s9 = inlined_call_operand.vmem [shape: f32[32,1], index: 9, kind: input, shape index: {}]
  %s10 = inlined_call_operand.vmem [shape: f32[32,32], index: 10, kind: input, shape index: {}]
  %s11 = inlined_call_operand.vmem [shape: f32[32,1], index: 11, kind: input, shape index: {}]
  %s12 = inlined_call_operand.hbm [shape: f32[32,128], index: 12, kind: output, shape index: {}]
  %s13 = sld [smem:[#allocation0]]
  $region85: #{_run_encoder.1} parent=0
    _
  %s15 = ssub.s32 1, %s13
  %s16 = scalar_select 0, %s15, %s13
  %17 = sst [smem:[#allocation4]] %s0
  %18 = sst [smem:[#allocation5]] %s1
  $region1: #{_run_encoder.1} parent=0
    #allocation6 [shape = 'u8[16384]{0}', space=vmem, size = 0x4000, scoped, tag = 'output window, operand 0, single buffered']
    #allocation7 [shape = 's32[2]{0}', space=sflag, size = 0x8, scoped, tag = 'scoped memory for _run_encoder.1']
    %19 = vsyncpa [#allocation7], 0
    loop: start=0, step=1, limit=5
    $region2: #{_run_encoder.1} parent=1 // loop_pre_header
      _
    $region3: #{_run_encoder.1} parent=1 // loop_header
      %s21 = sphi 0, %s25
      %p22 = scmp.ge.s32.totalorder %s21, 5
      %s28 = sphi 0, %s40
      %s29 = sphi 0, %s36
      %s30 = sphi 0, %s28
      %s31 = sphi 0, %s29
      %s32 = sphi 0, %s30
      %s33 = sphi 0, %s31
      %s43 = sphi 0, %s45
      %s46 = sphi 0, %s43
      %s47 = sphi 0, %s46
      %s63 = sphi 0, %s47
      %s69 = sphi 0, %s71
      %s72 = sphi 0, %s69
      %s73 = sphi 0, %s72
      %s89 = sphi 0, %s73
      %s95 = sphi 0, %s97
      %s98 = sphi 0, %s95
      %s99 = sphi 0, %s98
      %s115 = sphi 0, %s99
      %s121 = sphi 0, %s123
      %s124 = sphi 0, %s121
      %s125 = sphi 0, %s124
      %s141 = sphi 0, %s125
      %s145 = sphi 0, %s145
      %s147 = sphi 0, %s145
      %s148 = sphi 0, %s147
      %s162 = sphi 0, %s148
      %s166 = sphi 0, %s166
      %s168 = sphi 0, %s166
      %s169 = sphi 0, %s168
      %s183 = sphi 0, %s169
      %s187 = sphi 0, %s187
      %s189 = sphi 0, %s187
      %s190 = sphi 0, %s189
      %s204 = sphi 0, %s190
      %s208 = sphi 0, %s208
      %s210 = sphi 0, %s208
      %s211 = sphi 0, %s210
      %s225 = sphi 0, %s211
      %s229 = sphi 0, %s229
      %s231 = sphi 0, %s229
      %s232 = sphi 0, %s231
      %s246 = sphi 0, %s232
      %s250 = sphi 0, %s250
      %s252 = sphi 0, %s250
      %s253 = sphi 0, %s252
      %s267 = sphi 0, %s253
      %s273 = sphi 0, %s275
      %s276 = sphi 0, %s273
      %s277 = sphi 0, %s276
      %s293 = sphi 0, %s277
    $region4: #{_run_encoder.1} parent=1 // loop_header_branch
      %24 = sbr.rel (%p22) target = $region8
    $region5: #{_run_encoder.1} parent=1 // loop_body
      %s26 = ssub.s32 %s21, 1
      %s27 = ssub.s32 %s21, 2
      %s34 = sadd.s32 1, %s29
      %p35 = scmp.ge.s32.totalorder %s34, 3
      %s36 = scalar_select %p35, 0, %s34
      %s37 = sadd.s32 1, %s28
      %s38 = scalar_select %p35, %s37, %s28
      %p39 = scmp.ge.s32.totalorder %s38, 1
      %s40 = scalar_select %p39, 0, %s38
      %s41 = ssub.s32 %s29, %s36
      %p42 = scmp.eq.s32.totalorder %s41, 0
      %s44 = sadd.s32 %s43, 1
      %s45 = scalar_select %p42, %s43, %s44
      %p48 = pneg %p42
      %p49 = scmp.eq.s32.totalorder %s21, 2
      %p50 = por %p48, %p49
      %p51 = scmp.ne.s32.totalorder %s43, %s46
      %p52 = scmp.eq.s32.totalorder %s21, 0
      %p53 = por %p51, %p52
      %p54 = scmp.ne.s32.totalorder %s43, %s46
      %p55 = scmp.eq.s32.totalorder %s26, 2
      %p56 = por %p54, %p55
      %p57 = scmp.ne.s32.totalorder %s46, %s47
      %p58 = scmp.eq.s32.totalorder %s26, 0
      %p59 = por %p57, %p58
      %p60 = scmp.ne.s32.totalorder %s46, %s47
      %p61 = scmp.eq.s32.totalorder %s27, 2
      %p62 = por %p60, %p61
      %p64 = scmp.ne.s32.totalorder %s47, %s63
      %p65 = scmp.eq.s32.totalorder %s27, 0
      %p66 = por %p64, %p65
      %s67 = ssub.s32 %s28, %s40
      %p68 = scmp.eq.s32.totalorder %s67, 0
      %s70 = sadd.s32 %s69, 1
      %s71 = scalar_select %p68, %s69, %s70
      %p74 = pneg %p68
      %p75 = scmp.eq.s32.totalorder %s21, 2
      %p76 = por %p74, %p75
      %p77 = scmp.ne.s32.totalorder %s69, %s72
      %p78 = scmp.eq.s32.totalorder %s21, 0
      %p79 = por %p77, %p78
      %p80 = scmp.ne.s32.totalorder %s69, %s72
      %p81 = scmp.eq.s32.totalorder %s26, 2
      %p82 = por %p80, %p81
      %p83 = scmp.ne.s32.totalorder %s72, %s73
      %p84 = scmp.eq.s32.totalorder %s26, 0
      %p85 = por %p83, %p84
      %p86 = scmp.ne.s32.totalorder %s72, %s73
      %p87 = scmp.eq.s32.totalorder %s27, 2
      %p88 = por %p86, %p87
      %p90 = scmp.ne.s32.totalorder %s73, %s89
      %p91 = scmp.eq.s32.totalorder %s27, 0
      %p92 = por %p90, %p91
      %s93 = ssub.s32 %s28, %s40
      %p94 = scmp.eq.s32.totalorder %s93, 0
      %s96 = sadd.s32 %s95, 1
      %s97 = scalar_select %p94, %s95, %s96
      %p100 = pneg %p94
      %p101 = scmp.eq.s32.totalorder %s21, 2
      %p102 = por %p100, %p101
      %p103 = scmp.ne.s32.totalorder %s95, %s98
      %p104 = scmp.eq.s32.totalorder %s21, 0
      %p105 = por %p103, %p104
      %p106 = scmp.ne.s32.totalorder %s95, %s98
      %p107 = scmp.eq.s32.totalorder %s26, 2
      %p108 = por %p106, %p107
      %p109 = scmp.ne.s32.totalorder %s98, %s99
      %p110 = scmp.eq.s32.totalorder %s26, 0
      %p111 = por %p109, %p110
      %p112 = scmp.ne.s32.totalorder %s98, %s99
      %p113 = scmp.eq.s32.totalorder %s27, 2
      %p114 = por %p112, %p113
      %p116 = scmp.ne.s32.totalorder %s99, %s115
      %p117 = scmp.eq.s32.totalorder %s27, 0
      %p118 = por %p116, %p117
      %s119 = ssub.s32 %s28, %s40
      %p120 = scmp.eq.s32.totalorder %s119, 0
      %s122 = sadd.s32 %s121, 1
      %s123 = scalar_select %p120, %s121, %s122
      %p126 = pneg %p120
      %p127 = scmp.eq.s32.totalorder %s21, 2
      %p128 = por %p126, %p127
      %p129 = scmp.ne.s32.totalorder %s121, %s124
      %p130 = scmp.eq.s32.totalorder %s21, 0
      %p131 = por %p129, %p130
      %p132 = scmp.ne.s32.totalorder %s121, %s124
      %p133 = scmp.eq.s32.totalorder %s26, 2
      %p134 = por %p132, %p133
      %p135 = scmp.ne.s32.totalorder %s124, %s125
      %p136 = scmp.eq.s32.totalorder %s26, 0
      %p137 = por %p135, %p136
      %p138 = scmp.ne.s32.totalorder %s124, %s125
      %p139 = scmp.eq.s32.totalorder %s27, 2
      %p140 = por %p138, %p139
      %p142 = scmp.ne.s32.totalorder %s125, %s141
      %p143 = scmp.eq.s32.totalorder %s27, 0
      %p144 = por %p142, %p143
      %s146 = sadd.s32 %s145, 1
      %p149 = scmp.eq.s32.totalorder %s21, 2
      %p150 = scmp.ne.s32.totalorder %s145, %s147
      %p151 = scmp.eq.s32.totalorder %s21, 0
      %p152 = por %p150, %p151
      %p153 = scmp.ne.s32.totalorder %s145, %s147
      %p154 = scmp.eq.s32.totalorder %s26, 2
      %p155 = por %p153, %p154
      %p156 = scmp.ne.s32.totalorder %s147, %s148
      %p157 = scmp.eq.s32.totalorder %s26, 0
      %p158 = por %p156, %p157
      %p159 = scmp.ne.s32.totalorder %s147, %s148
      %p160 = scmp.eq.s32.totalorder %s27, 2
      %p161 = por %p159, %p160
      %p163 = scmp.ne.s32.totalorder %s148, %s162
      %p164 = scmp.eq.s32.totalorder %s27, 0
      %p165 = por %p163, %p164
      %s167 = sadd.s32 %s166, 1
      %p170 = scmp.eq.s32.totalorder %s21, 2
      %p171 = scmp.ne.s32.totalorder %s166, %s168
      %p172 = scmp.eq.s32.totalorder %s21, 0
      %p173 = por %p171, %p172
      %p174 = scmp.ne.s32.totalorder %s166, %s168
      %p175 = scmp.eq.s32.totalorder %s26, 2
      %p176 = por %p174, %p175
      %p177 = scmp.ne.s32.totalorder %s168, %s169
      %p178 = scmp.eq.s32.totalorder %s26, 0
      %p179 = por %p177, %p178
      %p180 = scmp.ne.s32.totalorder %s168, %s169
      %p181 = scmp.eq.s32.totalorder %s27, 2
      %p182 = por %p180, %p181
      %p184 = scmp.ne.s32.totalorder %s169, %s183
      %p185 = scmp.eq.s32.totalorder %s27, 0
      %p186 = por %p184, %p185
      %s188 = sadd.s32 %s187, 1
      %p191 = scmp.eq.s32.totalorder %s21, 2
      %p192 = scmp.ne.s32.totalorder %s187, %s189
      %p193 = scmp.eq.s32.totalorder %s21, 0
      %p194 = por %p192, %p193
      %p195 = scmp.ne.s32.totalorder %s187, %s189
      %p196 = scmp.eq.s32.totalorder %s26, 2
      %p197 = por %p195, %p196
      %p198 = scmp.ne.s32.totalorder %s189, %s190
      %p199 = scmp.eq.s32.totalorder %s26, 0
      %p200 = por %p198, %p199
      %p201 = scmp.ne.s32.totalorder %s189, %s190
      %p202 = scmp.eq.s32.totalorder %s27, 2
      %p203 = por %p201, %p202
      %p205 = scmp.ne.s32.totalorder %s190, %s204
      %p206 = scmp.eq.s32.totalorder %s27, 0
      %p207 = por %p205, %p206
      %s209 = sadd.s32 %s208, 1
      %p212 = scmp.eq.s32.totalorder %s21, 2
      %p213 = scmp.ne.s32.totalorder %s208, %s210
      %p214 = scmp.eq.s32.totalorder %s21, 0
      %p215 = por %p213, %p214
      %p216 = scmp.ne.s32.totalorder %s208, %s210
      %p217 = scmp.eq.s32.totalorder %s26, 2
      %p218 = por %p216, %p217
      %p219 = scmp.ne.s32.totalorder %s210, %s211
      %p220 = scmp.eq.s32.totalorder %s26, 0
      %p221 = por %p219, %p220
      %p222 = scmp.ne.s32.totalorder %s210, %s211
      %p223 = scmp.eq.s32.totalorder %s27, 2
      %p224 = por %p222, %p223
      %p226 = scmp.ne.s32.totalorder %s211, %s225
      %p227 = scmp.eq.s32.totalorder %s27, 0
      %p228 = por %p226, %p227
      %s230 = sadd.s32 %s229, 1
      %p233 = scmp.eq.s32.totalorder %s21, 2
      %p234 = scmp.ne.s32.totalorder %s229, %s231
      %p235 = scmp.eq.s32.totalorder %s21, 0
      %p236 = por %p234, %p235
      %p237 = scmp.ne.s32.totalorder %s229, %s231
      %p238 = scmp.eq.s32.totalorder %s26, 2
      %p239 = por %p237, %p238
      %p240 = scmp.ne.s32.totalorder %s231, %s232
      %p241 = scmp.eq.s32.totalorder %s26, 0
      %p242 = por %p240, %p241
      %p243 = scmp.ne.s32.totalorder %s231, %s232
      %p244 = scmp.eq.s32.totalorder %s27, 2
      %p245 = por %p243, %p244
      %p247 = scmp.ne.s32.totalorder %s232, %s246
      %p248 = scmp.eq.s32.totalorder %s27, 0
      %p249 = por %p247, %p248
      %s251 = sadd.s32 %s250, 1
      %p254 = scmp.eq.s32.totalorder %s21, 2
      %p255 = scmp.ne.s32.totalorder %s250, %s252
      %p256 = scmp.eq.s32.totalorder %s21, 0
      %p257 = por %p255, %p256
      %p258 = scmp.ne.s32.totalorder %s250, %s252
      %p259 = scmp.eq.s32.totalorder %s26, 2
      %p260 = por %p258, %p259
      %p261 = scmp.ne.s32.totalorder %s252, %s253
      %p262 = scmp.eq.s32.totalorder %s26, 0
      %p263 = por %p261, %p262
      %p264 = scmp.ne.s32.totalorder %s252, %s253
      %p265 = scmp.eq.s32.totalorder %s27, 2
      %p266 = por %p264, %p265
      %p268 = scmp.ne.s32.totalorder %s253, %s267
      %p269 = scmp.eq.s32.totalorder %s27, 0
      %p270 = por %p268, %p269
      %s271 = ssub.s32 %s28, %s40
      %p272 = scmp.eq.s32.totalorder %s271, 0
      %s274 = sadd.s32 %s273, 1
      %s275 = scalar_select %p272, %s273, %s274
      %p278 = pneg %p272
      %p279 = scmp.eq.s32.totalorder %s21, 2
      %p280 = por %p278, %p279
      %p281 = scmp.ne.s32.totalorder %s273, %s276
      %p282 = scmp.eq.s32.totalorder %s21, 0
      %p283 = por %p281, %p282
      %p284 = scmp.ne.s32.totalorder %s273, %s276
      %p285 = scmp.eq.s32.totalorder %s26, 2
      %p286 = por %p284, %p285
      %p287 = scmp.ne.s32.totalorder %s276, %s277
      %p288 = scmp.eq.s32.totalorder %s26, 0
      %p289 = por %p287, %p288
      %p290 = scmp.ne.s32.totalorder %s276, %s277
      %p291 = scmp.eq.s32.totalorder %s27, 2
      %p292 = por %p290, %p291
      %p294 = scmp.ne.s32.totalorder %s277, %s293
      %p295 = scmp.eq.s32.totalorder %s27, 0
      %p296 = por %p294, %p295
      %p297 = scmp.le.s32.totalorder 1, %s21
      %p298 = scmp.lt.s32.totalorder %s21, 4
      %p299 = pnand %p297, %p298
      %p300 = pneg %p299
      // Predicated region
      $region9: #{_run_encoder.1} parent=5 // pred_check
        _
      $region10: #{_run_encoder.1} parent=5 // pred_check_branch
        %302 = sbr.rel (%p299) target = $region12
      $region11: #{_run_encoder.1} parent=5 // pred_region
        %s303 = ssub.s32 %s21, 1
        // Predicated region
        $region13: #{_run_encoder.1} parent=11 // pred_check
          %p304 = pneg %p85
        $region14: #{_run_encoder.1} parent=11 // pred_check_branch
          %306 = sbr.rel (%p304) target = $region16
        $region15: #{_run_encoder.1} parent=11 // pred_region
          %p307 = scmp.lt.s32.totalorder %s30, 0
          %s308 = scalar_select %p307, %s30, 0
          %s309 = scalar_lea.vmem %s3, %s308
        $region16: #{_run_encoder.1} parent=11 // pred_fallthru
          _
        // Predicated region
        $region17: #{_run_encoder.1} parent=11 // pred_check
          %p310 = pneg %p111
        $region18: #{_run_encoder.1} parent=11 // pred_check_branch
          %312 = sbr.rel (%p310) target = $region20
        $region19: #{_run_encoder.1} parent=11 // pred_region
          %p313 = scmp.lt.s32.totalorder %s30, 0
          %s314 = scalar_select %p313, %s30, 0
          %s315 = scalar_lea.vmem %s4, %s314
        $region20: #{_run_encoder.1} parent=11 // pred_fallthru
          _
        // Predicated region
        $region21: #{_run_encoder.1} parent=11 // pred_check
          %p316 = pneg %p137
        $region22: #{_run_encoder.1} parent=11 // pred_check_branch
          %318 = sbr.rel (%p316) target = $region24
        $region23: #{_run_encoder.1} parent=11 // pred_region
          %p319 = scmp.lt.s32.totalorder %s30, 0
          %s320 = scalar_select %p319, %s30, 0
          %s321 = scalar_lea.vmem %s5, %s320
        $region24: #{_run_encoder.1} parent=11 // pred_fallthru
          _
        // Predicated region
        $region25: #{_run_encoder.1} parent=11 // pred_check
          %p322 = pneg %p158
        $region26: #{_run_encoder.1} parent=11 // pred_check_branch
          %324 = sbr.rel (%p322) target = $region28
        $region27: #{_run_encoder.1} parent=11 // pred_region
          _
        $region28: #{_run_encoder.1} parent=11 // pred_fallthru
          _
        // Predicated region
        $region29: #{_run_encoder.1} parent=11 // pred_check
          %p325 = pneg %p179
        $region30: #{_run_encoder.1} parent=11 // pred_check_branch
          %327 = sbr.rel (%p325) target = $region32
        $region31: #{_run_encoder.1} parent=11 // pred_region
          _
        $region32: #{_run_encoder.1} parent=11 // pred_fallthru
          _
        // Predicated region
        $region33: #{_run_encoder.1} parent=11 // pred_check
          %p328 = pneg %p200
        $region34: #{_run_encoder.1} parent=11 // pred_check_branch
          %330 = sbr.rel (%p328) target = $region36
        $region35: #{_run_encoder.1} parent=11 // pred_region
          _
        $region36: #{_run_encoder.1} parent=11 // pred_fallthru
          _
        // Predicated region
        $region37: #{_run_encoder.1} parent=11 // pred_check
          %p331 = pneg %p221
        $region38: #{_run_encoder.1} parent=11 // pred_check_branch
          %333 = sbr.rel (%p331) target = $region40
        $region39: #{_run_encoder.1} parent=11 // pred_region
          _
        $region40: #{_run_encoder.1} parent=11 // pred_fallthru
          _
        // Predicated region
        $region41: #{_run_encoder.1} parent=11 // pred_check
          %p334 = pneg %p242
        $region42: #{_run_encoder.1} parent=11 // pred_check_branch
          %336 = sbr.rel (%p334) target = $region44
        $region43: #{_run_encoder.1} parent=11 // pred_region
          _
        $region44: #{_run_encoder.1} parent=11 // pred_fallthru
          _
        // Predicated region
        $region45: #{_run_encoder.1} parent=11 // pred_check
          %p337 = pneg %p263
        $region46: #{_run_encoder.1} parent=11 // pred_check_branch
          %339 = sbr.rel (%p337) target = $region48
        $region47: #{_run_encoder.1} parent=11 // pred_region
          _
        $region48: #{_run_encoder.1} parent=11 // pred_fallthru
          _
      $region12: #{_run_encoder.1} parent=5 // pred_fallthru
        _
      %p340 = scmp.lt.s32.totalorder %s21, 3
      // Predicated region
      $region49: #{_run_encoder.1} parent=5 // pred_check
        %p341 = pneg %p340
      $region50: #{_run_encoder.1} parent=5 // pred_check_branch
        %343 = sbr.rel (%p341) target = $region52
      $region51: #{_run_encoder.1} parent=5 // pred_region
        // Predicated region
        $region53: #{_run_encoder.1} parent=51 // pred_check
          %p344 = pneg %p53
        $region54: #{_run_encoder.1} parent=51 // pred_check_branch
          %346 = sbr.rel (%p344) target = $region56
        $region55: #{_run_encoder.1} parent=51 // pred_region
          %s347 = smul.u32 4, %s29
          %p348 = scmp.lt.s32.totalorder %s347, 11
          %s349 = scalar_select %p348, %s347, 11
          %s350 = scalar_lea.vmem %s2, %s349
          %s351 = smul.u32 4, %s29
        $region56: #{_run_encoder.1} parent=51 // pred_fallthru
          _
      $region52: #{_run_encoder.1} parent=5 // pred_fallthru
        _
      %p352 = scmp.le.s32.totalorder 1, %s21
      %p353 = scmp.lt.s32.totalorder %s21, 4
      %p354 = pnand %p352, %p353
      %p355 = pneg %p354
      // Predicated region
      $region57: #{_run_encoder.1} parent=5 // pred_check
        _
      $region58: #{_run_encoder.1} parent=5 // pred_check_branch
        %357 = sbr.rel (%p354) target = $region60
      $region59: #{_run_encoder.1} parent=5 // pred_region
        %s358 = ssub.s32 %s21, 1
        %s359 = smul.u32 4, %s31
        %p360 = scmp.lt.s32.totalorder %s359, 11
        %s361 = scalar_select %p360, %s359, 11
        %s362 = scalar_lea.vmem %s2, %s361
        %p363 = pneg %p59
        %p364 = pneg %p56
        %p365 = scmp.lt.s32.totalorder %s30, 0
        %s366 = scalar_select %p365, %s30, 0
        %s367 = scalar_lea.vmem %s3, %s366
        %p368 = pneg %p85
        %p369 = pneg %p82
        %p370 = scmp.lt.s32.totalorder %s30, 0
        %s371 = scalar_select %p370, %s30, 0
        %s372 = scalar_lea.vmem %s4, %s371
        %p373 = pneg %p111
        %p374 = pneg %p108
        %p375 = scmp.lt.s32.totalorder %s30, 0
        %s376 = scalar_select %p375, %s30, 0
        %s377 = scalar_lea.vmem %s5, %s376
        %p378 = pneg %p137
        %p379 = pneg %p134
        %p380 = pneg %p158
        %p381 = pneg %p155
        %p382 = pneg %p179
        %p383 = pneg %p176
        %p384 = pneg %p200
        %p385 = pneg %p197
        %p386 = pneg %p221
        %p387 = pneg %p218
        %p388 = pneg %p242
        %p389 = pneg %p239
        %p390 = pneg %p263
        %p391 = pneg %p260
        %p392 = pneg %p289
        %p393 = pneg %p286
        %s394 = smul.u32 4, %s31
        %p395 = scmp.lt.s32.totalorder %s394, 11
        %s396 = scalar_select %p395, %s394, 11
        %s397 = scalar_lea.vmem %s2, %s396
        %s398 = smul.u32 4, %s31
        %p399 = scmp.lt.s32.totalorder %s30, 0
        %s400 = scalar_select %p399, %s30, 0
        %s401 = scalar_lea.vmem %s3, %s400
        %p402 = scmp.lt.s32.totalorder %s30, 0
        %s403 = scalar_select %p402, %s30, 0
        %s404 = scalar_lea.vmem %s4, %s403
        %p405 = scmp.lt.s32.totalorder %s30, 0
        %s406 = scalar_select %p405, %s30, 0
        %s407 = scalar_lea.vmem %s5, %s406
        %p408 = scmp.eq.s32.totalorder %s31, 0
        // Predicated region
        $region61: #{_run_encoder.1} parent=59 // pred_check
          %p409 = pneg %p408
        $region62: #{_run_encoder.1} parent=59 // pred_check_branch
          %411 = sbr.rel (%p409) target = $region64
        $region63: #{_run_encoder.1} parent=59 // pred_region
          %412 = vst [vmem:[#allocation2] sm:$0xff] 0.0
          %413 = vst [vmem:[#allocation2 + $0x8] sm:$0xff] 0.0
          %414 = vst [vmem:[#allocation2 + $0x10] sm:$0xff] 0.0
          %415 = vst [vmem:[#allocation2 + $0x18] sm:$0xff] 0.0
        $region64: #{_run_encoder.1} parent=59 // pred_fallthru
          _
        %s416 = smul.u32 %s31, 512
        %s417 = sld [smem:[#allocation4 + %s30]]
        %s418 = sadd.s32 %s416, 512
        %p419 = scmp.lt.s32.totalorder %s417, %s418
        %s420 = sld [smem:[#allocation5 + %s30]]
        %p421 = scmp.gt.s32.totalorder %s420, %s416
        %p422 = pnand %p419, %p421
        %p423 = pneg %p422
        // Predicated region
        $region65: #{_run_encoder.1} parent=59 // pred_check
          _
        $region66: #{_run_encoder.1} parent=59 // pred_check_branch
          %425 = sbr.rel (%p422) target = $region68
        $region67: #{_run_encoder.1} parent=59 // pred_region
          %v426 = vld [vmem:[%s397] sm:$0xf]
          %v427 = vunpack.c.l.bf16 %v426
          %v428 = vld [vmem:[%s6] sm:$0xff]
          %v429 = vld [vmem:[%s6 + $0x8] sm:$0xff]
          %v430 = vld [vmem:[%s6 + $0x10] sm:$0xff]
          %v431 = vld [vmem:[%s6 + $0x18] sm:$0xff]
          %433 = vset.pattern.permute.xlu0 0
          %434 = vperm.xlu0 %433, %v428
          %v435 = vpop.permute.xlu0 %434
          %438 = vset.pattern.permute.xlu0 0
          %439 = vperm.xlu0 %438, %v429
          %v440 = vpop.permute.xlu0 %439
          %443 = vset.pattern.permute.xlu0 0
          %444 = vperm.xlu0 %443, %v430
          %v445 = vpop.permute.xlu0 %444
          %448 = vset.pattern.permute.xlu0 0
          %449 = vperm.xlu0 %448, %v431
          %v450 = vpop.permute.xlu0 %449
          %v453 = vperm.slane %v427, 0
          %v454 = vperm.slane %v427, 2
          %v455 = vperm.slane %v427, 4
          %v456 = vperm.slane %v427, 6
          %v461 = vperm.slane %v453, 0
          %v462 = vperm.slane %v454, 0
          %v463 = vperm.slane %v455, 0
          %v464 = vperm.slane %v456, 0
          %v465 = vmul.f32 %v435, %v461
          %v466 = vmul.f32 %v435, %v462
          %v467 = vmul.f32 %v435, %v463
          %v468 = vmul.f32 %v435, %v464
          %v469 = vmul.f32 %v440, %v461
          %v470 = vmul.f32 %v440, %v462
          %v471 = vmul.f32 %v440, %v463
          %v472 = vmul.f32 %v440, %v464
          %v473 = vmul.f32 %v445, %v461
          %v474 = vmul.f32 %v445, %v462
          %v475 = vmul.f32 %v445, %v463
          %v476 = vmul.f32 %v445, %v464
          %v477 = vmul.f32 %v450, %v461
          %v478 = vmul.f32 %v450, %v462
          %v479 = vmul.f32 %v450, %v463
          %v480 = vmul.f32 %v450, %v464
          %v481 = vld [vmem:[%s7] sm:$0xff]
          %v482 = vld [vmem:[%s7 + $0x8] sm:$0xff]
          %v483 = vld [vmem:[%s7 + $0x10] sm:$0xff]
          %v484 = vld [vmem:[%s7 + $0x18] sm:$0xff]
          %486 = vset.pattern.permute.xlu0 0
          %487 = vperm.xlu0 %486, %v481
          %v488 = vpop.permute.xlu0 %487
          %491 = vset.pattern.permute.xlu0 0
          %492 = vperm.xlu0 %491, %v482
          %v493 = vpop.permute.xlu0 %492
          %496 = vset.pattern.permute.xlu0 0
          %497 = vperm.xlu0 %496, %v483
          %v498 = vpop.permute.xlu0 %497
          %501 = vset.pattern.permute.xlu0 0
          %502 = vperm.xlu0 %501, %v484
          %v503 = vpop.permute.xlu0 %502
          %v505 = vadd.f32 %v465, %v488
          %v506 = vadd.f32 %v466, %v488
          %v507 = vadd.f32 %v467, %v488
          %v508 = vadd.f32 %v468, %v488
          %v509 = vadd.f32 %v469, %v493
          %v510 = vadd.f32 %v470, %v493
          %v511 = vadd.f32 %v471, %v493
          %v512 = vadd.f32 %v472, %v493
          %v513 = vadd.f32 %v473, %v498
          %v514 = vadd.f32 %v474, %v498
          %v515 = vadd.f32 %v475, %v498
          %v516 = vadd.f32 %v476, %v498
          %v517 = vadd.f32 %v477, %v503
          %v518 = vadd.f32 %v478, %v503
          %v519 = vadd.f32 %v479, %v503
          %v520 = vadd.f32 %v480, %v503
          %v521 = vmax.f32 %v505, 0.0
          %v522 = vmax.f32 %v506, 0.0
          %v523 = vmax.f32 %v507, 0.0
          %v524 = vmax.f32 %v508, 0.0
          %v525 = vmax.f32 %v509, 0.0
          %v526 = vmax.f32 %v510, 0.0
          %v527 = vmax.f32 %v511, 0.0
          %v528 = vmax.f32 %v512, 0.0
          %v529 = vmax.f32 %v513, 0.0
          %v530 = vmax.f32 %v514, 0.0
          %v531 = vmax.f32 %v515, 0.0
          %v532 = vmax.f32 %v516, 0.0
          %v533 = vmax.f32 %v517, 0.0
          %v534 = vmax.f32 %v518, 0.0
          %v535 = vmax.f32 %v519, 0.0
          %v536 = vmax.f32 %v520, 0.0
          %v537 = vld [vmem:[%s8] sm:$0xff]
          %v538 = vld [vmem:[%s8 + $0x8] sm:$0xff]
          %v539 = vld [vmem:[%s8 + $0x10] sm:$0xff]
          %v540 = vld [vmem:[%s8 + $0x18] sm:$0xff]
          %v541 = vld [vmem:[%s9] sm:$0xff]
          %v542 = vld [vmem:[%s9 + $0x8] sm:$0xff]
          %v543 = vld [vmem:[%s9 + $0x10] sm:$0xff]
          %v544 = vld [vmem:[%s9 + $0x18] sm:$0xff]
          %546 = vset.pattern.permute.xlu0 0
          %547 = vperm.xlu0 %546, %v541
          %v548 = vpop.permute.xlu0 %547
          %551 = vset.pattern.permute.xlu0 0
          %552 = vperm.xlu0 %551, %v542
          %v553 = vpop.permute.xlu0 %552
          %556 = vset.pattern.permute.xlu0 0
          %557 = vperm.xlu0 %556, %v543
          %v558 = vpop.permute.xlu0 %557
          %561 = vset.pattern.permute.xlu0 0
          %562 = vperm.xlu0 %561, %v544
          %v563 = vpop.permute.xlu0 %562
          %vm565 = vcmask 261120
          %v567 = vsel %vm565, %v537, 0
          %v570 = vsel %vm565, %v538, 0
          %v573 = vsel %vm565, %v539, 0
          %v576 = vsel %vm565, %v540, 0
          %578 = vmatpush.msra.mxu0 0.0
          %579 = vmatpush.msra.mxu0 0.0
          %580 = vmatpush.msra.mxu0 0.0
          %581 = vmatpush.msra.mxu0 0.0
          %582 = vmatpush.msra.mxu0 0.0
          %583 = vmatpush.msra.mxu0 0.0
          %584 = vmatpush.msra.mxu0 0.0
          %585 = vmatpush.msra.mxu0 0.0
          %586 = vmatpush.msra.mxu0 0.0
          %587 = vmatpush.msra.mxu0 0.0
          %588 = vmatpush.msra.mxu0 0.0
          %589 = vmatpush.msra.mxu0 0.0
          %590 = vmatpush.msra.mxu0 %v533
          %591 = vmatpush.msra.mxu0 %v529
          %592 = vmatpush.msra.mxu0 %v525
          %593 = vmatpush.msra.mxu0 %v521
          %594 = vmatmul.f32.gmra.mxu0 %v567
          %v595 = vpop.f32.mrf.mxu0
          %v596 = vadd.f32 %v548, %v595
          %597 = vmatmul.f32.gmra.mxu0 %v570
          %v598 = vpop.f32.mrf.mxu0
          %v599 = vadd.f32 %v553, %v598
          %600 = vmatmul.f32.gmra.mxu0 %v573
          %v601 = vpop.f32.mrf.mxu0
          %v602 = vadd.f32 %v558, %v601
          %603 = vmatmul.f32.gmra.mxu0 %v576
          %v604 = vpop.f32.mrf.mxu0
          %v605 = vadd.f32 %v563, %v604
          %606 = vdwg.mxu0
          %607 = vmatpush.msra.mxu0 0.0
          %608 = vmatpush.msra.mxu0 0.0
          %609 = vmatpush.msra.mxu0 0.0
          %610 = vmatpush.msra.mxu0 0.0
          %611 = vmatpush.msra.mxu0 0.0
          %612 = vmatpush.msra.mxu0 0.0
          %613 = vmatpush.msra.mxu0 0.0
          %614 = vmatpush.msra.mxu0 0.0
          %615 = vmatpush.msra.mxu0 0.0
          %616 = vmatpush.msra.mxu0 0.0
          %617 = vmatpush.msra.mxu0 0.0
          %618 = vmatpush.msra.mxu0 0.0
          %619 = vmatpush.msra.mxu0 %v534
          %620 = vmatpush.msra.mxu0 %v530
          %621 = vmatpush.msra.mxu0 %v526
          %622 = vmatpush.msra.mxu0 %v522
          %623 = vmatmul.f32.gmra.mxu0 %v567
          %v624 = vpop.f32.mrf.mxu0
          %v625 = vadd.f32 %v548, %v624
          %626 = vmatmul.f32.gmra.mxu0 %v570
          %v627 = vpop.f32.mrf.mxu0
          %v628 = vadd.f32 %v553, %v627
          %629 = vmatmul.f32.gmra.mxu0 %v573
          %v630 = vpop.f32.mrf.mxu0
          %v631 = vadd.f32 %v558, %v630
          %632 = vmatmul.f32.gmra.mxu0 %v576
          %v633 = vpop.f32.mrf.mxu0
          %v634 = vadd.f32 %v563, %v633
          %635 = vdwg.mxu0
          %636 = vmatpush.msra.mxu0 0.0
          %637 = vmatpush.msra.mxu0 0.0
          %638 = vmatpush.msra.mxu0 0.0
          %639 = vmatpush.msra.mxu0 0.0
          %640 = vmatpush.msra.mxu0 0.0
          %641 = vmatpush.msra.mxu0 0.0
          %642 = vmatpush.msra.mxu0 0.0
          %643 = vmatpush.msra.mxu0 0.0
          %644 = vmatpush.msra.mxu0 0.0
          %645 = vmatpush.msra.mxu0 0.0
          %646 = vmatpush.msra.mxu0 0.0
          %647 = vmatpush.msra.mxu0 0.0
          %648 = vmatpush.msra.mxu0 %v535
          %649 = vmatpush.msra.mxu0 %v531
          %650 = vmatpush.msra.mxu0 %v527
          %651 = vmatpush.msra.mxu0 %v523
          %652 = vmatmul.f32.gmra.mxu0 %v567
          %v653 = vpop.f32.mrf.mxu0
          %v654 = vadd.f32 %v548, %v653
          %655 = vmatmul.f32.gmra.mxu0 %v570
          %v656 = vpop.f32.mrf.mxu0
          %v657 = vadd.f32 %v553, %v656
          %658 = vmatmul.f32.gmra.mxu0 %v573
          %v659 = vpop.f32.mrf.mxu0
          %v660 = vadd.f32 %v558, %v659
          %661 = vmatmul.f32.gmra.mxu0 %v576
          %v662 = vpop.f32.mrf.mxu0
          %v663 = vadd.f32 %v563, %v662
          %664 = vdwg.mxu0
          %665 = vmatpush.msra.mxu0 0.0
          %666 = vmatpush.msra.mxu0 0.0
          %667 = vmatpush.msra.mxu0 0.0
          %668 = vmatpush.msra.mxu0 0.0
          %669 = vmatpush.msra.mxu0 0.0
          %670 = vmatpush.msra.mxu0 0.0
          %671 = vmatpush.msra.mxu0 0.0
          %672 = vmatpush.msra.mxu0 0.0
          %673 = vmatpush.msra.mxu0 0.0
          %674 = vmatpush.msra.mxu0 0.0
          %675 = vmatpush.msra.mxu0 0.0
          %676 = vmatpush.msra.mxu0 0.0
          %677 = vmatpush.msra.mxu0 %v536
          %678 = vmatpush.msra.mxu0 %v532
          %679 = vmatpush.msra.mxu0 %v528
          %680 = vmatpush.msra.mxu0 %v524
          %681 = vmatmul.f32.gmra.mxu0 %v567
          %v682 = vpop.f32.mrf.mxu0
          %v683 = vadd.f32 %v548, %v682
          %684 = vmatmul.f32.gmra.mxu0 %v570
          %v685 = vpop.f32.mrf.mxu0
          %v686 = vadd.f32 %v553, %v685
          %687 = vmatmul.f32.gmra.mxu0 %v573
          %v688 = vpop.f32.mrf.mxu0
          %v689 = vadd.f32 %v558, %v688
          %690 = vmatmul.f32.gmra.mxu0 %v576
          %v691 = vpop.f32.mrf.mxu0
          %v692 = vadd.f32 %v563, %v691
          %693 = vdwg.mxu0
          %v694 = vmax.f32 %v596, 0.0
          %v695 = vmax.f32 %v625, 0.0
          %v696 = vmax.f32 %v654, 0.0
          %v697 = vmax.f32 %v683, 0.0
          %v698 = vmax.f32 %v599, 0.0
          %v699 = vmax.f32 %v628, 0.0
          %v700 = vmax.f32 %v657, 0.0
          %v701 = vmax.f32 %v686, 0.0
          %v702 = vmax.f32 %v602, 0.0
          %v703 = vmax.f32 %v631, 0.0
          %v704 = vmax.f32 %v660, 0.0
          %v705 = vmax.f32 %v689, 0.0
          %v706 = vmax.f32 %v605, 0.0
          %v707 = vmax.f32 %v634, 0.0
          %v708 = vmax.f32 %v663, 0.0
          %v709 = vmax.f32 %v692, 0.0
          %v710 = vlaneseq
          %v711 = vshrl.u32 %v710, 7
          %v712 = vadd.s32 %v711, 8
          %v713 = vadd.s32 %v711, 16
          %v714 = vadd.s32 %v711, 24
          %v715 = vadd.s32 %v711, 32
          %v716 = vadd.s32 %v711, 40
          %v717 = vadd.s32 %v711, 48
          %v718 = vadd.s32 %v711, 56
          %v719 = vadd.s32 %v711, 64
          %v720 = vadd.s32 %v711, 72
          %v721 = vadd.s32 %v711, 80
          %v722 = vadd.s32 %v711, 88
          %v723 = vadd.s32 %v711, 96
          %v724 = vadd.s32 %v711, 104
          %v725 = vadd.s32 %v711, 112
          %v726 = vadd.s32 %v711, 120
          %v727 = vadd.s32 %v711, 128
          %v728 = vadd.s32 %v711, 136
          %v729 = vadd.s32 %v711, 144
          %v730 = vadd.s32 %v711, 152
          %v731 = vadd.s32 %v711, 160
          %v732 = vadd.s32 %v711, 168
          %v733 = vadd.s32 %v711, 176
          %v734 = vadd.s32 %v711, 184
          %v735 = vadd.s32 %v711, 192
          %v736 = vadd.s32 %v711, 200
          %v737 = vadd.s32 %v711, 208
          %v738 = vadd.s32 %v711, 216
          %v739 = vadd.s32 %v711, 224
          %v740 = vadd.s32 %v711, 232
          %v741 = vadd.s32 %v711, 240
          %v742 = vadd.s32 %v711, 248
          %v743 = vadd.s32 %v711, 256
          %v744 = vadd.s32 %v711, 264
          %v745 = vadd.s32 %v711, 272
          %v746 = vadd.s32 %v711, 280
          %v747 = vadd.s32 %v711, 288
          %v748 = vadd.s32 %v711, 296
          %v749 = vadd.s32 %v711, 304
          %v750 = vadd.s32 %v711, 312
          %v751 = vadd.s32 %v711, 320
          %v752 = vadd.s32 %v711, 328
          %v753 = vadd.s32 %v711, 336
          %v754 = vadd.s32 %v711, 344
          %v755 = vadd.s32 %v711, 352
          %v756 = vadd.s32 %v711, 360
          %v757 = vadd.s32 %v711, 368
          %v758 = vadd.s32 %v711, 376
          %v759 = vadd.s32 %v711, 384
          %v760 = vadd.s32 %v711, 392
          %v761 = vadd.s32 %v711, 400
          %v762 = vadd.s32 %v711, 408
          %v763 = vadd.s32 %v711, 416
          %v764 = vadd.s32 %v711, 424
          %v765 = vadd.s32 %v711, 432
          %v766 = vadd.s32 %v711, 440
          %v767 = vadd.s32 %v711, 448
          %v768 = vadd.s32 %v711, 456
          %v769 = vadd.s32 %v711, 464
          %v770 = vadd.s32 %v711, 472
          %v771 = vadd.s32 %v711, 480
          %v772 = vadd.s32 %v711, 488
          %v773 = vadd.s32 %v711, 496
          %v774 = vadd.s32 %v711, 504
          %v775 = vstv %s416
          %v776 = vadd.s32 %v711, %v775
          %v777 = vadd.s32 %v712, %v775
          %v778 = vadd.s32 %v713, %v775
          %v779 = vadd.s32 %v714, %v775
          %v780 = vadd.s32 %v715, %v775
          %v781 = vadd.s32 %v716, %v775
          %v782 = vadd.s32 %v717, %v775
          %v783 = vadd.s32 %v718, %v775
          %v784 = vadd.s32 %v719, %v775
          %v785 = vadd.s32 %v720, %v775
          %v786 = vadd.s32 %v721, %v775
          %v787 = vadd.s32 %v722, %v775
          %v788 = vadd.s32 %v723, %v775
          %v789 = vadd.s32 %v724, %v775
          %v790 = vadd.s32 %v725, %v775
          %v791 = vadd.s32 %v726, %v775
          %v792 = vadd.s32 %v727, %v775
          %v793 = vadd.s32 %v728, %v775
          %v794 = vadd.s32 %v729, %v775
          %v795 = vadd.s32 %v730, %v775
          %v796 = vadd.s32 %v731, %v775
          %v797 = vadd.s32 %v732, %v775
          %v798 = vadd.s32 %v733, %v775
          %v799 = vadd.s32 %v734, %v775
          %v800 = vadd.s32 %v735, %v775
          %v801 = vadd.s32 %v736, %v775
          %v802 = vadd.s32 %v737, %v775
          %v803 = vadd.s32 %v738, %v775
          %v804 = vadd.s32 %v739, %v775
          %v805 = vadd.s32 %v740, %v775
          %v806 = vadd.s32 %v741, %v775
          %v807 = vadd.s32 %v742, %v775
          %v808 = vadd.s32 %v743, %v775
          %v809 = vadd.s32 %v744, %v775
          %v810 = vadd.s32 %v745, %v775
          %v811 = vadd.s32 %v746, %v775
          %v812 = vadd.s32 %v747, %v775
          %v813 = vadd.s32 %v748, %v775
          %v814 = vadd.s32 %v749, %v775
          %v815 = vadd.s32 %v750, %v775
          %v816 = vadd.s32 %v751, %v775
          %v817 = vadd.s32 %v752, %v775
          %v818 = vadd.s32 %v753, %v775
          %v819 = vadd.s32 %v754, %v775
          %v820 = vadd.s32 %v755, %v775
          %v821 = vadd.s32 %v756, %v775
          %v822 = vadd.s32 %v757, %v775
          %v823 = vadd.s32 %v758, %v775
          %v824 = vadd.s32 %v759, %v775
          %v825 = vadd.s32 %v760, %v775
          %v826 = vadd.s32 %v761, %v775
          %v827 = vadd.s32 %v762, %v775
          %v828 = vadd.s32 %v763, %v775
          %v829 = vadd.s32 %v764, %v775
          %v830 = vadd.s32 %v765, %v775
          %v831 = vadd.s32 %v766, %v775
          %v832 = vadd.s32 %v767, %v775
          %v833 = vadd.s32 %v768, %v775
          %v834 = vadd.s32 %v769, %v775
          %v835 = vadd.s32 %v770, %v775
          %v836 = vadd.s32 %v771, %v775
          %v837 = vadd.s32 %v772, %v775
          %v838 = vadd.s32 %v773, %v775
          %v839 = vadd.s32 %v774, %v775
          %v840 = vld [vmem:[%s401] sm:$0x1]
          %v841 = vperm.slane %v840, 0
          %vm842 = vcmp.ge.s32.totalorder %v776, %v841
          %vm843 = vcmp.ge.s32.totalorder %v777, %v841
          %vm844 = vcmp.ge.s32.totalorder %v778, %v841
          %vm845 = vcmp.ge.s32.totalorder %v779, %v841
          %vm846 = vcmp.ge.s32.totalorder %v780, %v841
          %vm847 = vcmp.ge.s32.totalorder %v781, %v841
          %vm848 = vcmp.ge.s32.totalorder %v782, %v841
          %vm849 = vcmp.ge.s32.totalorder %v783, %v841
          %vm850 = vcmp.ge.s32.totalorder %v784, %v841
          %vm851 = vcmp.ge.s32.totalorder %v785, %v841
          %vm852 = vcmp.ge.s32.totalorder %v786, %v841
          %vm853 = vcmp.ge.s32.totalorder %v787, %v841
          %vm854 = vcmp.ge.s32.totalorder %v788, %v841
          %vm855 = vcmp.ge.s32.totalorder %v789, %v841
          %vm856 = vcmp.ge.s32.totalorder %v790, %v841
          %vm857 = vcmp.ge.s32.totalorder %v791, %v841
          %vm858 = vcmp.ge.s32.totalorder %v792, %v841
          %vm859 = vcmp.ge.s32.totalorder %v793, %v841
          %vm860 = vcmp.ge.s32.totalorder %v794, %v841
          %vm861 = vcmp.ge.s32.totalorder %v795, %v841
          %vm862 = vcmp.ge.s32.totalorder %v796, %v841
          %vm863 = vcmp.ge.s32.totalorder %v797, %v841
          %vm864 = vcmp.ge.s32.totalorder %v798, %v841
          %vm865 = vcmp.ge.s32.totalorder %v799, %v841
          %vm866 = vcmp.ge.s32.totalorder %v800, %v841
          %vm867 = vcmp.ge.s32.totalorder %v801, %v841
          %vm868 = vcmp.ge.s32.totalorder %v802, %v841
          %vm869 = vcmp.ge.s32.totalorder %v803, %v841
          %vm870 = vcmp.ge.s32.totalorder %v804, %v841
          %vm871 = vcmp.ge.s32.totalorder %v805, %v841
          %vm872 = vcmp.ge.s32.totalorder %v806, %v841
          %vm873 = vcmp.ge.s32.totalorder %v807, %v841
          %vm874 = vcmp.ge.s32.totalorder %v808, %v841
          %vm875 = vcmp.ge.s32.totalorder %v809, %v841
          %vm876 = vcmp.ge.s32.totalorder %v810, %v841
          %vm877 = vcmp.ge.s32.totalorder %v811, %v841
          %vm878 = vcmp.ge.s32.totalorder %v812, %v841
          %vm879 = vcmp.ge.s32.totalorder %v813, %v841
          %vm880 = vcmp.ge.s32.totalorder %v814, %v841
          %vm881 = vcmp.ge.s32.totalorder %v815, %v841
          %vm882 = vcmp.ge.s32.totalorder %v816, %v841
          %vm883 = vcmp.ge.s32.totalorder %v817, %v841
          %vm884 = vcmp.ge.s32.totalorder %v818, %v841
          %vm885 = vcmp.ge.s32.totalorder %v819, %v841
          %vm886 = vcmp.ge.s32.totalorder %v820, %v841
          %vm887 = vcmp.ge.s32.totalorder %v821, %v841
          %vm888 = vcmp.ge.s32.totalorder %v822, %v841
          %vm889 = vcmp.ge.s32.totalorder %v823, %v841
          %vm890 = vcmp.ge.s32.totalorder %v824, %v841
          %vm891 = vcmp.ge.s32.totalorder %v825, %v841
          %vm892 = vcmp.ge.s32.totalorder %v826, %v841
          %vm893 = vcmp.ge.s32.totalorder %v827, %v841
          %vm894 = vcmp.ge.s32.totalorder %v828, %v841
          %vm895 = vcmp.ge.s32.totalorder %v829, %v841
          %vm896 = vcmp.ge.s32.totalorder %v830, %v841
          %vm897 = vcmp.ge.s32.totalorder %v831, %v841
          %vm898 = vcmp.ge.s32.totalorder %v832, %v841
          %vm899 = vcmp.ge.s32.totalorder %v833, %v841
          %vm900 = vcmp.ge.s32.totalorder %v834, %v841
          %vm901 = vcmp.ge.s32.totalorder %v835, %v841
          %vm902 = vcmp.ge.s32.totalorder %v836, %v841
          %vm903 = vcmp.ge.s32.totalorder %v837, %v841
          %vm904 = vcmp.ge.s32.totalorder %v838, %v841
          %vm905 = vcmp.ge.s32.totalorder %v839, %v841
          %v906 = vld [vmem:[%s404] sm:$0x1]
          %v907 = vperm.slane %v906, 0
          %vm908 = vcmp.lt.s32.totalorder %v776, %v907
          %vm909 = vcmp.lt.s32.totalorder %v777, %v907
          %vm910 = vcmp.lt.s32.totalorder %v778, %v907
          %vm911 = vcmp.lt.s32.totalorder %v779, %v907
          %vm912 = vcmp.lt.s32.totalorder %v780, %v907
          %vm913 = vcmp.lt.s32.totalorder %v781, %v907
          %vm914 = vcmp.lt.s32.totalorder %v782, %v907
          %vm915 = vcmp.lt.s32.totalorder %v783, %v907
          %vm916 = vcmp.lt.s32.totalorder %v784, %v907
          %vm917 = vcmp.lt.s32.totalorder %v785, %v907
          %vm918 = vcmp.lt.s32.totalorder %v786, %v907
          %vm919 = vcmp.lt.s32.totalorder %v787, %v907
          %vm920 = vcmp.lt.s32.totalorder %v788, %v907
          %vm921 = vcmp.lt.s32.totalorder %v789, %v907
          %vm922 = vcmp.lt.s32.totalorder %v790, %v907
          %vm923 = vcmp.lt.s32.totalorder %v791, %v907
          %vm924 = vcmp.lt.s32.totalorder %v792, %v907
          %vm925 = vcmp.lt.s32.totalorder %v793, %v907
          %vm926 = vcmp.lt.s32.totalorder %v794, %v907
          %vm927 = vcmp.lt.s32.totalorder %v795, %v907
          %vm928 = vcmp.lt.s32.totalorder %v796, %v907
          %vm929 = vcmp.lt.s32.totalorder %v797, %v907
          %vm930 = vcmp.lt.s32.totalorder %v798, %v907
          %vm931 = vcmp.lt.s32.totalorder %v799, %v907
          %vm932 = vcmp.lt.s32.totalorder %v800, %v907
          %vm933 = vcmp.lt.s32.totalorder %v801, %v907
          %vm934 = vcmp.lt.s32.totalorder %v802, %v907
          %vm935 = vcmp.lt.s32.totalorder %v803, %v907
          %vm936 = vcmp.lt.s32.totalorder %v804, %v907
          %vm937 = vcmp.lt.s32.totalorder %v805, %v907
          %vm938 = vcmp.lt.s32.totalorder %v806, %v907
          %vm939 = vcmp.lt.s32.totalorder %v807, %v907
          %vm940 = vcmp.lt.s32.totalorder %v808, %v907
          %vm941 = vcmp.lt.s32.totalorder %v809, %v907
          %vm942 = vcmp.lt.s32.totalorder %v810, %v907
          %vm943 = vcmp.lt.s32.totalorder %v811, %v907
          %vm944 = vcmp.lt.s32.totalorder %v812, %v907
          %vm945 = vcmp.lt.s32.totalorder %v813, %v907
          %vm946 = vcmp.lt.s32.totalorder %v814, %v907
          %vm947 = vcmp.lt.s32.totalorder %v815, %v907
          %vm948 = vcmp.lt.s32.totalorder %v816, %v907
          %vm949 = vcmp.lt.s32.totalorder %v817, %v907
          %vm950 = vcmp.lt.s32.totalorder %v818, %v907
          %vm951 = vcmp.lt.s32.totalorder %v819, %v907
          %vm952 = vcmp.lt.s32.totalorder %v820, %v907
          %vm953 = vcmp.lt.s32.totalorder %v821, %v907
          %vm954 = vcmp.lt.s32.totalorder %v822, %v907
          %vm955 = vcmp.lt.s32.totalorder %v823, %v907
          %vm956 = vcmp.lt.s32.totalorder %v824, %v907
          %vm957 = vcmp.lt.s32.totalorder %v825, %v907
          %vm958 = vcmp.lt.s32.totalorder %v826, %v907
          %vm959 = vcmp.lt.s32.totalorder %v827, %v907
          %vm960 = vcmp.lt.s32.totalorder %v828, %v907
          %vm961 = vcmp.lt.s32.totalorder %v829, %v907
          %vm962 = vcmp.lt.s32.totalorder %v830, %v907
          %vm963 = vcmp.lt.s32.totalorder %v831, %v907
          %vm964 = vcmp.lt.s32.totalorder %v832, %v907
          %vm965 = vcmp.lt.s32.totalorder %v833, %v907
          %vm966 = vcmp.lt.s32.totalorder %v834, %v907
          %vm967 = vcmp.lt.s32.totalorder %v835, %v907
          %vm968 = vcmp.lt.s32.totalorder %v836, %v907
          %vm969 = vcmp.lt.s32.totalorder %v837, %v907
          %vm970 = vcmp.lt.s32.totalorder %v838, %v907
          %vm971 = vcmp.lt.s32.totalorder %v839, %v907
          %vm972 = vmand %vm842, %vm908
          %vm973 = vmand %vm843, %vm909
          %vm974 = vmand %vm844, %vm910
          %vm975 = vmand %vm845, %vm911
          %vm976 = vmand %vm846, %vm912
          %vm977 = vmand %vm847, %vm913
          %vm978 = vmand %vm848, %vm914
          %vm979 = vmand %vm849, %vm915
          %vm980 = vmand %vm850, %vm916
          %vm981 = vmand %vm851, %vm917
          %vm982 = vmand %vm852, %vm918
          %vm983 = vmand %vm853, %vm919
          %vm984 = vmand %vm854, %vm920
          %vm985 = vmand %vm855, %vm921
          %vm986 = vmand %vm856, %vm922
          %vm987 = vmand %vm857, %vm923
          %vm988 = vmand %vm858, %vm924
          %vm989 = vmand %vm859, %vm925
          %vm990 = vmand %vm860, %vm926
          %vm991 = vmand %vm861, %vm927
          %vm992 = vmand %vm862, %vm928
          %vm993 = vmand %vm863, %vm929
          %vm994 = vmand %vm864, %vm930
          %vm995 = vmand %vm865, %vm931
          %vm996 = vmand %vm866, %vm932
          %vm997 = vmand %vm867, %vm933
          %vm998 = vmand %vm868, %vm934
          %vm999 = vmand %vm869, %vm935
          %vm1000 = vmand %vm870, %vm936
          %vm1001 = vmand %vm871, %vm937
          %vm1002 = vmand %vm872, %vm938
          %vm1003 = vmand %vm873, %vm939
          %vm1004 = vmand %vm874, %vm940
          %vm1005 = vmand %vm875, %vm941
          %vm1006 = vmand %vm876, %vm942
          %vm1007 = vmand %vm877, %vm943
          %vm1008 = vmand %vm878, %vm944
          %vm1009 = vmand %vm879, %vm945
          %vm1010 = vmand %vm880, %vm946
          %vm1011 = vmand %vm881, %vm947
          %vm1012 = vmand %vm882, %vm948
          %vm1013 = vmand %vm883, %vm949
          %vm1014 = vmand %vm884, %vm950
          %vm1015 = vmand %vm885, %vm951
          %vm1016 = vmand %vm886, %vm952
          %vm1017 = vmand %vm887, %vm953
          %vm1018 = vmand %vm888, %vm954
          %vm1019 = vmand %vm889, %vm955
          %vm1020 = vmand %vm890, %vm956
          %vm1021 = vmand %vm891, %vm957
          %vm1022 = vmand %vm892, %vm958
          %vm1023 = vmand %vm893, %vm959
          %vm1024 = vmand %vm894, %vm960
          %vm1025 = vmand %vm895, %vm961
          %vm1026 = vmand %vm896, %vm962
          %vm1027 = vmand %vm897, %vm963
          %vm1028 = vmand %vm898, %vm964
          %vm1029 = vmand %vm899, %vm965
          %vm1030 = vmand %vm900, %vm966
          %vm1031 = vmand %vm901, %vm967
          %vm1032 = vmand %vm902, %vm968
          %vm1033 = vmand %vm903, %vm969
          %vm1034 = vmand %vm904, %vm970
          %vm1035 = vmand %vm905, %vm971
          %v1036 = vsel %vm972, 1, 0
          %v1037 = vsel %vm973, 1, 0
          %v1038 = vsel %vm974, 1, 0
          %v1039 = vsel %vm975, 1, 0
          %v1040 = vsel %vm976, 1, 0
          %v1041 = vsel %vm977, 1, 0
          %v1042 = vsel %vm978, 1, 0
          %v1043 = vsel %vm979, 1, 0
          %v1044 = vsel %vm980, 1, 0
          %v1045 = vsel %vm981, 1, 0
          %v1046 = vsel %vm982, 1, 0
          %v1047 = vsel %vm983, 1, 0
          %v1048 = vsel %vm984, 1, 0
          %v1049 = vsel %vm985, 1, 0
          %v1050 = vsel %vm986, 1, 0
          %v1051 = vsel %vm987, 1, 0
          %v1052 = vsel %vm988, 1, 0
          %v1053 = vsel %vm989, 1, 0
          %v1054 = vsel %vm990, 1, 0
          %v1055 = vsel %vm991, 1, 0
          %v1056 = vsel %vm992, 1, 0
          %v1057 = vsel %vm993, 1, 0
          %v1058 = vsel %vm994, 1, 0
          %v1059 = vsel %vm995, 1, 0
          %v1060 = vsel %vm996, 1, 0
          %v1061 = vsel %vm997, 1, 0
          %v1062 = vsel %vm998, 1, 0
          %v1063 = vsel %vm999, 1, 0
          %v1064 = vsel %vm1000, 1, 0
          %v1065 = vsel %vm1001, 1, 0
          %v1066 = vsel %vm1002, 1, 0
          %v1067 = vsel %vm1003, 1, 0
          %v1068 = vsel %vm1004, 1, 0
          %v1069 = vsel %vm1005, 1, 0
          %v1070 = vsel %vm1006, 1, 0
          %v1071 = vsel %vm1007, 1, 0
          %v1072 = vsel %vm1008, 1, 0
          %v1073 = vsel %vm1009, 1, 0
          %v1074 = vsel %vm1010, 1, 0
          %v1075 = vsel %vm1011, 1, 0
          %v1076 = vsel %vm1012, 1, 0
          %v1077 = vsel %vm1013, 1, 0
          %v1078 = vsel %vm1014, 1, 0
          %v1079 = vsel %vm1015, 1, 0
          %v1080 = vsel %vm1016, 1, 0
          %v1081 = vsel %vm1017, 1, 0
          %v1082 = vsel %vm1018, 1, 0
          %v1083 = vsel %vm1019, 1, 0
          %v1084 = vsel %vm1020, 1, 0
          %v1085 = vsel %vm1021, 1, 0
          %v1086 = vsel %vm1022, 1, 0
          %v1087 = vsel %vm1023, 1, 0
          %v1088 = vsel %vm1024, 1, 0
          %v1089 = vsel %vm1025, 1, 0
          %v1090 = vsel %vm1026, 1, 0
          %v1091 = vsel %vm1027, 1, 0
          %v1092 = vsel %vm1028, 1, 0
          %v1093 = vsel %vm1029, 1, 0
          %v1094 = vsel %vm1030, 1, 0
          %v1095 = vsel %vm1031, 1, 0
          %v1096 = vsel %vm1032, 1, 0
          %v1097 = vsel %vm1033, 1, 0
          %v1098 = vsel %vm1034, 1, 0
          %v1099 = vsel %vm1035, 1, 0
          %v1100 = vcvt.s32.f32 %v1036
          %v1101 = vcvt.s32.f32 %v1037
          %v1102 = vcvt.s32.f32 %v1038
          %v1103 = vcvt.s32.f32 %v1039
          %v1104 = vcvt.s32.f32 %v1040
          %v1105 = vcvt.s32.f32 %v1041
          %v1106 = vcvt.s32.f32 %v1042
          %v1107 = vcvt.s32.f32 %v1043
          %v1108 = vcvt.s32.f32 %v1044
          %v1109 = vcvt.s32.f32 %v1045
          %v1110 = vcvt.s32.f32 %v1046
          %v1111 = vcvt.s32.f32 %v1047
          %v1112 = vcvt.s32.f32 %v1048
          %v1113 = vcvt.s32.f32 %v1049
          %v1114 = vcvt.s32.f32 %v1050
          %v1115 = vcvt.s32.f32 %v1051
          %v1116 = vcvt.s32.f32 %v1052
          %v1117 = vcvt.s32.f32 %v1053
          %v1118 = vcvt.s32.f32 %v1054
          %v1119 = vcvt.s32.f32 %v1055
          %v1120 = vcvt.s32.f32 %v1056
          %v1121 = vcvt.s32.f32 %v1057
          %v1122 = vcvt.s32.f32 %v1058
          %v1123 = vcvt.s32.f32 %v1059
          %v1124 = vcvt.s32.f32 %v1060
          %v1125 = vcvt.s32.f32 %v1061
          %v1126 = vcvt.s32.f32 %v1062
          %v1127 = vcvt.s32.f32 %v1063
          %v1128 = vcvt.s32.f32 %v1064
          %v1129 = vcvt.s32.f32 %v1065
          %v1130 = vcvt.s32.f32 %v1066
          %v1131 = vcvt.s32.f32 %v1067
          %v1132 = vcvt.s32.f32 %v1068
          %v1133 = vcvt.s32.f32 %v1069
          %v1134 = vcvt.s32.f32 %v1070
          %v1135 = vcvt.s32.f32 %v1071
          %v1136 = vcvt.s32.f32 %v1072
          %v1137 = vcvt.s32.f32 %v1073
          %v1138 = vcvt.s32.f32 %v1074
          %v1139 = vcvt.s32.f32 %v1075
          %v1140 = vcvt.s32.f32 %v1076
          %v1141 = vcvt.s32.f32 %v1077
          %v1142 = vcvt.s32.f32 %v1078
          %v1143 = vcvt.s32.f32 %v1079
          %v1144 = vcvt.s32.f32 %v1080
          %v1145 = vcvt.s32.f32 %v1081
          %v1146 = vcvt.s32.f32 %v1082
          %v1147 = vcvt.s32.f32 %v1083
          %v1148 = vcvt.s32.f32 %v1084
          %v1149 = vcvt.s32.f32 %v1085
          %v1150 = vcvt.s32.f32 %v1086
          %v1151 = vcvt.s32.f32 %v1087
          %v1152 = vcvt.s32.f32 %v1088
          %v1153 = vcvt.s32.f32 %v1089
          %v1154 = vcvt.s32.f32 %v1090
          %v1155 = vcvt.s32.f32 %v1091
          %v1156 = vcvt.s32.f32 %v1092
          %v1157 = vcvt.s32.f32 %v1093
          %v1158 = vcvt.s32.f32 %v1094
          %v1159 = vcvt.s32.f32 %v1095
          %v1160 = vcvt.s32.f32 %v1096
          %v1161 = vcvt.s32.f32 %v1097
          %v1162 = vcvt.s32.f32 %v1098
          %v1163 = vcvt.s32.f32 %v1099
          %v1164 = vld [vmem:[#allocation2] sm:$0xff]
          %v1165 = vld [vmem:[#allocation2 + $0x8] sm:$0xff]
          %v1166 = vld [vmem:[#allocation2 + $0x10] sm:$0xff]
          %v1167 = vld [vmem:[#allocation2 + $0x18] sm:$0xff]
          %1168 = vmatpush.msra.mxu0 %v1115
          %1169 = vmatpush.msra.mxu0 %v1114
          %1170 = vmatpush.msra.mxu0 %v1113
          %1171 = vmatpush.msra.mxu0 %v1112
          %1172 = vmatpush.msra.mxu0 %v1111
          %1173 = vmatpush.msra.mxu0 %v1110
          %1174 = vmatpush.msra.mxu0 %v1109
          %1175 = vmatpush.msra.mxu0 %v1108
          %1176 = vmatpush.msra.mxu0 %v1107
          %1177 = vmatpush.msra.mxu0 %v1106
          %1178 = vmatpush.msra.mxu0 %v1105
          %1179 = vmatpush.msra.mxu0 %v1104
          %1180 = vmatpush.msra.mxu0 %v1103
          %1181 = vmatpush.msra.mxu0 %v1102
          %1182 = vmatpush.msra.mxu0 %v1101
          %1183 = vmatpush.msra.mxu0 %v1100
          %1184 = vmatmul.f32.gmra.mxu0 %v694
          %v1185 = vpop.f32.mrf.mxu0
          %v1186 = vadd.f32 0.0, %v1185
          %1187 = vmatmul.f32.gmra.mxu0 %v698
          %v1188 = vpop.f32.mrf.mxu0
          %v1189 = vadd.f32 0.0, %v1188
          %1190 = vmatmul.f32.gmra.mxu0 %v702
          %v1191 = vpop.f32.mrf.mxu0
          %v1192 = vadd.f32 0.0, %v1191
          %1193 = vmatmul.f32.gmra.mxu0 %v706
          %v1194 = vpop.f32.mrf.mxu0
          %v1195 = vadd.f32 0.0, %v1194
          %1196 = vdwg.mxu0
          %1197 = vmatpush.msra.mxu0 %v1131
          %1198 = vmatpush.msra.mxu0 %v1130
          %1199 = vmatpush.msra.mxu0 %v1129
          %1200 = vmatpush.msra.mxu0 %v1128
          %1201 = vmatpush.msra.mxu0 %v1127
          %1202 = vmatpush.msra.mxu0 %v1126
          %1203 = vmatpush.msra.mxu0 %v1125
          %1204 = vmatpush.msra.mxu0 %v1124
          %1205 = vmatpush.msra.mxu0 %v1123
          %1206 = vmatpush.msra.mxu0 %v1122
          %1207 = vmatpush.msra.mxu0 %v1121
          %1208 = vmatpush.msra.mxu0 %v1120
          %1209 = vmatpush.msra.mxu0 %v1119
          %1210 = vmatpush.msra.mxu0 %v1118
          %1211 = vmatpush.msra.mxu0 %v1117
          %1212 = vmatpush.msra.mxu0 %v1116
          %1213 = vmatmul.f32.gmra.mxu0 %v695
          %v1214 = vpop.f32.mrf.mxu0
          %v1215 = vadd.f32 %v1186, %v1214
          %1216 = vmatmul.f32.gmra.mxu0 %v699
          %v1217 = vpop.f32.mrf.mxu0
          %v1218 = vadd.f32 %v1189, %v1217
          %1219 = vmatmul.f32.gmra.mxu0 %v703
          %v1220 = vpop.f32.mrf.mxu0
          %v1221 = vadd.f32 %v1192, %v1220
          %1222 = vmatmul.f32.gmra.mxu0 %v707
          %v1223 = vpop.f32.mrf.mxu0
          %v1224 = vadd.f32 %v1195, %v1223
          %1225 = vdwg.mxu0
          %1226 = vmatpush.msra.mxu0 %v1147
          %1227 = vmatpush.msra.mxu0 %v1146
          %1228 = vmatpush.msra.mxu0 %v1145
          %1229 = vmatpush.msra.mxu0 %v1144
          %1230 = vmatpush.msra.mxu0 %v1143
          %1231 = vmatpush.msra.mxu0 %v1142
          %1232 = vmatpush.msra.mxu0 %v1141
          %1233 = vmatpush.msra.mxu0 %v1140
          %1234 = vmatpush.msra.mxu0 %v1139
          %1235 = vmatpush.msra.mxu0 %v1138
          %1236 = vmatpush.msra.mxu0 %v1137
          %1237 = vmatpush.msra.mxu0 %v1136
          %1238 = vmatpush.msra.mxu0 %v1135
          %1239 = vmatpush.msra.mxu0 %v1134
          %1240 = vmatpush.msra.mxu0 %v1133
          %1241 = vmatpush.msra.mxu0 %v1132
          %1242 = vmatmul.f32.gmra.mxu0 %v696
          %v1243 = vpop.f32.mrf.mxu0
          %v1244 = vadd.f32 %v1215, %v1243
          %1245 = vmatmul.f32.gmra.mxu0 %v700
          %v1246 = vpop.f32.mrf.mxu0
          %v1247 = vadd.f32 %v1218, %v1246
          %1248 = vmatmul.f32.gmra.mxu0 %v704
          %v1249 = vpop.f32.mrf.mxu0
          %v1250 = vadd.f32 %v1221, %v1249
          %1251 = vmatmul.f32.gmra.mxu0 %v708
          %v1252 = vpop.f32.mrf.mxu0
          %v1253 = vadd.f32 %v1224, %v1252
          %1254 = vdwg.mxu0
          %1255 = vmatpush.msra.mxu0 %v1163
          %1256 = vmatpush.msra.mxu0 %v1162
          %1257 = vmatpush.msra.mxu0 %v1161
          %1258 = vmatpush.msra.mxu0 %v1160
          %1259 = vmatpush.msra.mxu0 %v1159
          %1260 = vmatpush.msra.mxu0 %v1158
          %1261 = vmatpush.msra.mxu0 %v1157
          %1262 = vmatpush.msra.mxu0 %v1156
          %1263 = vmatpush.msra.mxu0 %v1155
          %1264 = vmatpush.msra.mxu0 %v1154
          %1265 = vmatpush.msra.mxu0 %v1153
          %1266 = vmatpush.msra.mxu0 %v1152
          %1267 = vmatpush.msra.mxu0 %v1151
          %1268 = vmatpush.msra.mxu0 %v1150
          %1269 = vmatpush.msra.mxu0 %v1149
          %1270 = vmatpush.msra.mxu0 %v1148
          %1271 = vmatmul.f32.gmra.mxu0 %v697
          %v1272 = vpop.f32.mrf.mxu0
          %v1273 = vadd.f32 %v1244, %v1272
          %1274 = vmatmul.f32.gmra.mxu0 %v701
          %v1275 = vpop.f32.mrf.mxu0
          %v1276 = vadd.f32 %v1247, %v1275
          %1277 = vmatmul.f32.gmra.mxu0 %v705
          %v1278 = vpop.f32.mrf.mxu0
          %v1279 = vadd.f32 %v1250, %v1278
          %1280 = vmatmul.f32.gmra.mxu0 %v709
          %v1281 = vpop.f32.mrf.mxu0
          %v1282 = vadd.f32 %v1253, %v1281
          %1283 = vdwg.mxu0
          %v1284 = vadd.f32 %v1164, %v1273
          %v1285 = vadd.f32 %v1165, %v1276
          %v1286 = vadd.f32 %v1166, %v1279
          %v1287 = vadd.f32 %v1167, %v1282
          %1288 = vst [vmem:[#allocation2] sm:$0xff] %v1284
          %1289 = vst [vmem:[#allocation2 + $0x8] sm:$0xff] %v1285
          %1290 = vst [vmem:[#allocation2 + $0x10] sm:$0xff] %v1286
          %1291 = vst [vmem:[#allocation2 + $0x18] sm:$0xff] %v1287
        $region68: #{_run_encoder.1} parent=59 // pred_fallthru
          _
        %p1292 = scmp.eq.s32.totalorder %s31, 2
        // Predicated region
        $region69: #{_run_encoder.1} parent=59 // pred_check
          %p1293 = pneg %p1292
        $region70: #{_run_encoder.1} parent=59 // pred_check_branch
          %1295 = sbr.rel (%p1293) target = $region72
        $region71: #{_run_encoder.1} parent=59 // pred_region
          %v1296 = vld [vmem:[%s407] sm:$0x1]
          %v1297 = vrcp.pop %v1296
          %v1298 = vld [vmem:[#allocation2] sm:$0xff]
          %v1299 = vld [vmem:[#allocation2 + $0x8] sm:$0xff]
          %v1300 = vld [vmem:[#allocation2 + $0x10] sm:$0xff]
          %v1301 = vld [vmem:[#allocation2 + $0x18] sm:$0xff]
          %v1303 = vperm.slane %v1297, 0
          %v1305 = vmul.f32 %v1298, %v1303
          %v1306 = vmul.f32 %v1299, %v1303
          %v1307 = vmul.f32 %v1300, %v1303
          %v1308 = vmul.f32 %v1301, %v1303
          %v1309 = vld [vmem:[%s10] sm:$0xff]
          %v1310 = vld [vmem:[%s10 + $0x8] sm:$0xff]
          %v1311 = vld [vmem:[%s10 + $0x10] sm:$0xff]
          %v1312 = vld [vmem:[%s10 + $0x18] sm:$0xff]
          %v1313 = vld [vmem:[%s11] sm:$0xff]
          %v1314 = vld [vmem:[%s11 + $0x8] sm:$0xff]
          %v1315 = vld [vmem:[%s11 + $0x10] sm:$0xff]
          %v1316 = vld [vmem:[%s11 + $0x18] sm:$0xff]
          %1318 = vset.pattern.permute.xlu0 0
          %1319 = vperm.xlu0 %1318, %v1313
          %v1320 = vpop.permute.xlu0 %1319
          %1323 = vset.pattern.permute.xlu0 0
          %1324 = vperm.xlu0 %1323, %v1314
          %v1325 = vpop.permute.xlu0 %1324
          %1328 = vset.pattern.permute.xlu0 0
          %1329 = vperm.xlu0 %1328, %v1315
          %v1330 = vpop.permute.xlu0 %1329
          %1333 = vset.pattern.permute.xlu0 0
          %1334 = vperm.xlu0 %1333, %v1316
          %v1335 = vpop.permute.xlu0 %1334
          %vm1337 = vcmask 261120
          %v1339 = vsel %vm1337, %v1309, 0
          %v1342 = vsel %vm1337, %v1310, 0
          %v1345 = vsel %vm1337, %v1311, 0
          %v1348 = vsel %vm1337, %v1312, 0
          %1350 = vmatpush.msra.mxu0 0.0
          %1351 = vmatpush.msra.mxu0 0.0
          %1352 = vmatpush.msra.mxu0 0.0
          %1353 = vmatpush.msra.mxu0 0.0
          %1354 = vmatpush.msra.mxu0 0.0
          %1355 = vmatpush.msra.mxu0 0.0
          %1356 = vmatpush.msra.mxu0 0.0
          %1357 = vmatpush.msra.mxu0 0.0
          %1358 = vmatpush.msra.mxu0 0.0
          %1359 = vmatpush.msra.mxu0 0.0
          %1360 = vmatpush.msra.mxu0 0.0
          %1361 = vmatpush.msra.mxu0 0.0
          %1362 = vmatpush.msra.mxu0 %v1308
          %1363 = vmatpush.msra.mxu0 %v1307
          %1364 = vmatpush.msra.mxu0 %v1306
          %1365 = vmatpush.msra.mxu0 %v1305
          %1366 = vmatmul.f32.gmra.mxu0 %v1339
          %v1367 = vpop.f32.mrf.mxu0
          %v1368 = vadd.f32 %v1320, %v1367
          %1369 = vmatmul.f32.gmra.mxu0 %v1342
          %v1370 = vpop.f32.mrf.mxu0
          %v1371 = vadd.f32 %v1325, %v1370
          %1372 = vmatmul.f32.gmra.mxu0 %v1345
          %v1373 = vpop.f32.mrf.mxu0
          %v1374 = vadd.f32 %v1330, %v1373
          %1375 = vmatmul.f32.gmra.mxu0 %v1348
          %v1376 = vpop.f32.mrf.mxu0
          %v1377 = vadd.f32 %v1335, %v1376
          %1378 = vdwg.mxu0
          %1379 = vst [vmem:[#allocation6] sm:$0xff] %v1368
          %1380 = vst [vmem:[#allocation6 + $0x8] sm:$0xff] %v1371
          %1381 = vst [vmem:[#allocation6 + $0x10] sm:$0xff] %v1374
          %1382 = vst [vmem:[#allocation6 + $0x18] sm:$0xff] %v1377
        $region72: #{_run_encoder.1} parent=59 // pred_fallthru
          _
        // Predicated region
        $region73: #{_run_encoder.1} parent=59 // pred_check
          %p1383 = pneg %p286
        $region74: #{_run_encoder.1} parent=59 // pred_check_branch
          %1385 = sbr.rel (%p1383) target = $region76
        $region75: #{_run_encoder.1} parent=59 // pred_region
          %1387 = vsyncadd [#allocation7], 0
          %s1388 = smul.addr %s30, 8
          %s1389 = scalar_lea.hbm %s12, %s1388
          %s1390 = sshll.u32 [#allocation6], 4
          %s1391 = int_to_ptr.vmem [resolvable:$true] %s1390
          %s1392 = sshll.u32 %s1389, 4
          %s1393 = int_to_ptr.hbm [resolvable:$true] %s1392
          %1398 = dma.vmem_to_hbm [thread:$0]  %s1391, 512, %s1393, [#allocation7], 128, 128, 8
        $region76: #{_run_encoder.1} parent=59 // pred_fallthru
          _
        // Predicated region
        $region77: #{_run_encoder.1} parent=59 // pred_check
          %p1399 = pneg %p286
        $region78: #{_run_encoder.1} parent=59 // pred_check_branch
          %1401 = sbr.rel (%p1399) target = $region80
        $region79: #{_run_encoder.1} parent=59 // pred_region
          %1403 = dma.done [#allocation7], 512
        $region80: #{_run_encoder.1} parent=59 // pred_fallthru
          _
      $region60: #{_run_encoder.1} parent=5 // pred_fallthru
        _
      %p1404 = scmp.le.s32.totalorder 2, %s21
      // Predicated region
      $region81: #{_run_encoder.1} parent=5 // pred_check
        %p1405 = pneg %p1404
      $region82: #{_run_encoder.1} parent=5 // pred_check_branch
        %1407 = sbr.rel (%p1405) target = $region84
      $region83: #{_run_encoder.1} parent=5 // pred_region
        %s1408 = ssub.s32 %s21, 2
      $region84: #{_run_encoder.1} parent=5 // pred_fallthru
        _
    $region6: #{_run_encoder.1} parent=1 // loop_footer
      %s25 = sadd.s32 1, %s21
    $region7: #{_run_encoder.1} parent=1 // loop_footer_branch
      %20 = sbr.rel target = $region3
    $region8: #{_run_encoder.1} parent=1 // loop_exit
      _
    %1409 = vsyncpa [#allocation7], 1
    %s1410 = scalar_lea.sflag [#allocation7], 1
    %1411 = vsyncpa %s1410, 1

</llo_original>
